<compile_context>
chip_gen: v6e
topology: v6e:2x2x1
jax: 0.10.0
libtpu: 0.0.40
codegen_flags: <defaults>
</compile_context>

<pallas_src>
import numpy as np
import jax
import jax.numpy as jnp
from jax.experimental import pallas as pl
from jax.experimental.pallas import tpu as pltpu


# ----------------------------------------------------------------------------
# helpers
# ----------------------------------------------------------------------------
def fold_bn(bias, bn, cout, eps=1e-5):
    """Fold conv bias + inference-mode BatchNorm into per-channel scale/shift."""
    b = bias if bias is not None else jnp.zeros((cout,), jnp.float32)
    if bn is None:
        return jnp.ones((cout,), jnp.float32), b.astype(jnp.float32)
    s = bn["gamma"] / jnp.sqrt(bn["var"] + eps)
    t = (b - bn["mean"]) * s + bn["beta"]
    return s.astype(jnp.float32), t.astype(jnp.float32)


def _interp_matrix(s_in):
    """Row-interpolation matrix for bilinear x2 upsample, align_corners=True."""
    s_out = 2 * s_in
    A = np.zeros((s_out, s_in), np.float32)
    for i in range(s_out):
        src = i * (s_in - 1) / (s_out - 1) if s_out > 1 else 0.0
        i0 = min(int(np.floor(src)), s_in - 1)
        frac = src - i0
        i1 = min(i0 + 1, s_in - 1)
        A[i, i0] += 1.0 - frac
        A[i, i1] += frac
    return A


# ----------------------------------------------------------------------------
# fused Pallas kernel: conv1+BN+ReLU -> bilinear x2+BN+ReLU -> conv3+BN+ReLU
# ----------------------------------------------------------------------------
def _decoder_block_kernel(x_ref, w1_ref, s1_ref, t1_ref, kup_ref,
                          s2_ref, t2_ref, w3_ref, s3_ref, t3_ref, o_ref):
    # x_ref block: (1, Cin, H*W) f32 -- one image, NCHW layout, lane-dense.
    x = x_ref[0].astype(jnp.bfloat16)                                  # (Cin, HW)

    # --- conv1 (1x1) + BN1 + ReLU, channel-major ---------------------------
    y1 = jnp.dot(w1_ref[...], x, preferred_element_type=jnp.float32)   # (Cmid, HW)
    y1 = jnp.maximum(y1 * s1_ref[...] + t1_ref[...], 0.0)

    # --- bilinear x2 upsample (align_corners=True) + BN2 + ReLU ------------
    # up(c, i*2W+j) = sum_{h,w} y1(c, h*W+w) * Ah[i,h] * Aw[j,w]
    up = jnp.dot(y1.astype(jnp.bfloat16), kup_ref[...],
                 preferred_element_type=jnp.float32)                    # (Cmid, 4HW)
    up = jnp.maximum(up * s2_ref[...] + t2_ref[...], 0.0)

    # --- conv3 (1x1) + BN3 + ReLU, writes NCHW directly --------------------
    y3 = jnp.dot(w3_ref[...], up.astype(jnp.bfloat16),
                 preferred_element_type=jnp.float32)                    # (Cout, 4HW)
    y3 = jnp.maximum(y3 * s3_ref[...] + t3_ref[...], 0.0)

    o_ref[0] = y3.astype(o_ref.dtype)


def decoder_block_forward(x_nchw, p):
    N, Cin, H, W = x_nchw.shape
    Cmid = p["conv1_w"].shape[0]
    Cout = p["conv3_w"].shape[0]
    HW, HW4 = H * W, 4 * H * W

    # weights as plain matrices (torch 1x1-conv layout (Cout, Cin, 1, 1))
    w1 = p["conv1_w"].reshape(Cmid, Cin).astype(jnp.bfloat16)           # (Cmid, Cin)
    w3 = p["conv3_w"].reshape(Cout, Cmid).astype(jnp.bfloat16)          # (Cout, Cmid)

    # folded (bias + BN) per-channel scale / shift, kept f32
    s1, t1 = fold_bn(p["conv1_b"], p["bn1"], Cmid)
    s2, t2 = fold_bn(None, p["bn2"], Cmid)
    s3, t3 = fold_bn(p["conv3_b"], p["bn3"], Cout)

    # single upsample matrix: kron(Ah, Aw)^T, shape (H*W, 2H*2W), bf16 operand
    Ah = _interp_matrix(H)                                               # (2H, H)
    Aw = _interp_matrix(W)                                               # (2W, W)
    kup = jnp.asarray(np.kron(Ah, Aw).T, dtype=jnp.bfloat16)             # (HW, 4HW)

    xs = x_nchw.reshape(N, Cin, HW)                                      # free reshape

    out = pl.pallas_call(
        _decoder_block_kernel,
        out_shape=jax.ShapeDtypeStruct((N, Cout, HW4), jnp.float32),
        grid=(N,),
        in_specs=[
            pl.BlockSpec((1, Cin, HW), lambda n: (n, 0, 0)),             # x (per image)
            pl.BlockSpec((Cmid, Cin), lambda n: (0, 0)),                 # W1
            pl.BlockSpec((Cmid, 1), lambda n: (0, 0)),                   # s1
            pl.BlockSpec((Cmid, 1), lambda n: (0, 0)),                   # t1
            pl.BlockSpec((HW, HW4), lambda n: (0, 0)),                   # kron(Ah,Aw)^T
            pl.BlockSpec((Cmid, 1), lambda n: (0, 0)),                   # s2
            pl.BlockSpec((Cmid, 1), lambda n: (0, 0)),                   # t2
            pl.BlockSpec((Cout, Cmid), lambda n: (0, 0)),                # W3
            pl.BlockSpec((Cout, 1), lambda n: (0, 0)),                   # s3
            pl.BlockSpec((Cout, 1), lambda n: (0, 0)),                   # t3
        ],
        out_specs=pl.BlockSpec((1, Cout, HW4), lambda n: (n, 0, 0)),
        compiler_params=pltpu.CompilerParams(dimension_semantics=("parallel",)),
    )(xs, w1, s1.reshape(Cmid, 1), t1.reshape(Cmid, 1), kup,
      s2.reshape(Cmid, 1), t2.reshape(Cmid, 1), w3,
      s3.reshape(Cout, 1), t3.reshape(Cout, 1))

    return out.reshape(N, Cout, 2 * H, 2 * W)                            # free reshape


# ----------------------------------------------------------------------------
# pure-JAX f32 reference (same inference-mode BN semantics) for validation
# ----------------------------------------------------------------------------
def decoder_block_reference(x, p):
    N, Cin, H, W = x.shape
    Cmid = p["conv1_w"].shape[0]
    Cout = p["conv3_w"].shape[0]
    x = x.astype(jnp.float32)

    w1 = p["conv1_w"].reshape(Cmid, Cin)
    s1, t1 = fold_bn(p["conv1_b"], p["bn1"], Cmid)
    y = jnp.einsum("ck,nkhw->nchw", w1, x)
    y = jnp.maximum(y * s1[None, :, None, None] + t1[None, :, None, None], 0.0)

    Ah = jnp.asarray(_interp_matrix(H))
    Aw = jnp.asarray(_interp_matrix(W))
    y = jnp.einsum("ih,nchw->nciw", Ah, y)
    y = jnp.einsum("jw,nciw->ncij", Aw, y)
    s2, t2 = fold_bn(None, p["bn2"], Cmid)
    y = jnp.maximum(y * s2[None, :, None, None] + t2[None, :, None, None], 0.0)

    w3 = p["conv3_w"].reshape(Cout, Cmid)
    s3, t3 = fold_bn(p["conv3_b"], p["bn3"], Cout)
    y = jnp.einsum("dc,nchw->ndhw", w3, y)
    y = jnp.maximum(y * s3[None, :, None, None] + t3[None, :, None, None], 0.0)
    return y


# ----------------------------------------------------------------------------
# deterministic synthetic parameters
# ----------------------------------------------------------------------------
def build_params(key, in_channels, n_filters):
    mid = in_channels // 4
    ks = iter(jax.random.split(key, 8))

    def bn(kk, c):
        k1, k2, k3 = jax.random.split(kk, 3)
        return dict(gamma=1.0 + 0.1 * jax.random.normal(k1, (c,), jnp.float32),
                    beta=0.1 * jax.random.normal(k2, (c,), jnp.float32),
                    mean=0.1 * jax.random.normal(k3, (c,), jnp.float32),
                    var=jnp.ones((c,), jnp.float32))

    return dict(
        conv1_w=jax.random.normal(next(ks), (mid, in_channels, 1, 1), jnp.float32)
        * np.sqrt(2.0 / in_channels),
        conv1_b=0.01 * jax.random.normal(next(ks), (mid,), jnp.float32),
        bn1=bn(next(ks), mid),
        bn2=bn(next(ks), mid),
        conv3_w=jax.random.normal(next(ks), (n_filters, mid, 1, 1), jnp.float32)
        * np.sqrt(2.0 / mid),
        conv3_b=0.01 * jax.random.normal(next(ks), (n_filters,), jnp.float32),
        bn3=bn(next(ks), n_filters),
    )


# ----------------------------------------------------------------------------
if __name__ == "__main__":
    N, IN_CH, N_FILTERS, H, W = 2, 128, 64, 16, 16

    key = jax.random.PRNGKey(0)
    kx, kp = jax.random.split(key)
    params = build_params(kp, IN_CH, N_FILTERS)
    x = jax.random.normal(kx, (N, IN_CH, H, W), jnp.float32)

    fwd = jax.jit(decoder_block_forward)
    out = jax.block_until_ready(fwd(x, params))

    assert out.shape == (N, N_FILTERS, 2 * H, 2 * W), out.shape
    assert bool(jnp.all(jnp.isfinite(out)))
    assert bool(jnp.all(out >= 0.0))                       # final ReLU

    ref = decoder_block_reference(x, params)
    err = float(jnp.max(jnp.abs(out - ref)) / (jnp.max(jnp.abs(ref)) + 1e-6))
    assert err < 5e-2, f"max normalized error {err}"       # bf16-operand tolerance

    print("KERNEL_OK")
</pallas_src>

<mosaic_0001>
module attributes {stable_mosaic.version = 11 : i64} {
  func.func @_decoder_block_kernel(%arg0: i32, %arg1: memref<1x128x256xf32, #tpu.memory_space<vmem>>, %arg2: memref<32x128xbf16, #tpu.memory_space<vmem>>, %arg3: memref<32x1xf32, #tpu.memory_space<vmem>>, %arg4: memref<32x1xf32, #tpu.memory_space<vmem>>, %arg5: memref<256x1024xbf16, #tpu.memory_space<vmem>>, %arg6: memref<32x1xf32, #tpu.memory_space<vmem>>, %arg7: memref<32x1xf32, #tpu.memory_space<vmem>>, %arg8: memref<64x32xbf16, #tpu.memory_space<vmem>>, %arg9: memref<64x1xf32, #tpu.memory_space<vmem>>, %arg10: memref<64x1xf32, #tpu.memory_space<vmem>>, %arg11: memref<1x64x1024xf32, #tpu.memory_space<vmem>>) attributes {dimension_semantics = [#tpu.dimension_semantics<parallel>], iteration_bounds = array<i64: 2>, scalar_prefetch = 0 : i64, scratch_operands = 0 : i64, tpu.core_type = #tpu.core_type<tc>, window_params = [{transform_indices = @transform_0, window_bounds = array<i64: 1, 128, 256>}, {pipeline_mode = #tpu.pipeline_mode<synchronous>, transform_indices = @transform_1, window_bounds = array<i64: 32, 128>}, {pipeline_mode = #tpu.pipeline_mode<synchronous>, transform_indices = @transform_2, window_bounds = array<i64: 32, 1>}, {pipeline_mode = #tpu.pipeline_mode<synchronous>, transform_indices = @transform_3, window_bounds = array<i64: 32, 1>}, {pipeline_mode = #tpu.pipeline_mode<synchronous>, transform_indices = @transform_4, window_bounds = array<i64: 256, 1024>}, {pipeline_mode = #tpu.pipeline_mode<synchronous>, transform_indices = @transform_5, window_bounds = array<i64: 32, 1>}, {pipeline_mode = #tpu.pipeline_mode<synchronous>, transform_indices = @transform_6, window_bounds = array<i64: 32, 1>}, {pipeline_mode = #tpu.pipeline_mode<synchronous>, transform_indices = @transform_7, window_bounds = array<i64: 64, 32>}, {pipeline_mode = #tpu.pipeline_mode<synchronous>, transform_indices = @transform_8, window_bounds = array<i64: 64, 1>}, {pipeline_mode = #tpu.pipeline_mode<synchronous>, transform_indices = @transform_9, window_bounds = array<i64: 64, 1>}, {transform_indices = @transform_10, window_bounds = array<i64: 1, 64, 1024>}]} {
    %c0 = arith.constant 0 : index
    %c0_0 = arith.constant 0 : index
    %c0_1 = arith.constant 0 : index
    %0 = vector.load %arg1[%c0, %c0_0, %c0_1] : memref<1x128x256xf32, #tpu.memory_space<vmem>>, vector<1x128x256xf32>
    %1 = vector.shape_cast %0 : vector<1x128x256xf32> to vector<128x256xf32>
    %2 = arith.truncf %1 : vector<128x256xf32> to vector<128x256xbf16>
    %c0_2 = arith.constant 0 : index
    %c0_3 = arith.constant 0 : index
    %3 = vector.load %arg2[%c0_2, %c0_3] : memref<32x128xbf16, #tpu.memory_space<vmem>>, vector<32x128xbf16>
    %cst = arith.constant dense<0.000000e+00> : vector<32x256xf32>
    %4 = tpu.matmul %3, %2, %cst {dimension_numbers = #tpu.dot_dimension_numbers<[1], [0], [0], [1], [0, 0, 1, 1], [], []>} : vector<32x128xbf16>, vector<128x256xbf16>, vector<32x256xf32> -> vector<32x256xf32>
    %c0_4 = arith.constant 0 : index
    %c0_5 = arith.constant 0 : index
    %5 = vector.load %arg3[%c0_4, %c0_5] : memref<32x1xf32, #tpu.memory_space<vmem>>, vector<32x1xf32>
    %6 = vector.broadcast %5 : vector<32x1xf32> to vector<32x256xf32>
    %7 = arith.mulf %4, %6 : vector<32x256xf32>
    %c0_6 = arith.constant 0 : index
    %c0_7 = arith.constant 0 : index
    %8 = vector.load %arg4[%c0_6, %c0_7] : memref<32x1xf32, #tpu.memory_space<vmem>>, vector<32x1xf32>
    %9 = vector.broadcast %8 : vector<32x1xf32> to vector<32x256xf32>
    %10 = arith.addf %7, %9 : vector<32x256xf32>
    %cst_8 = arith.constant 0.000000e+00 : f32
    %11 = vector.broadcast %cst_8 : f32 to vector<32x256xf32>
    %12 = arith.maximumf %10, %11 : vector<32x256xf32>
    %13 = arith.truncf %12 : vector<32x256xf32> to vector<32x256xbf16>
    %c0_9 = arith.constant 0 : index
    %c0_10 = arith.constant 0 : index
    %14 = vector.load %arg5[%c0_9, %c0_10] : memref<256x1024xbf16, #tpu.memory_space<vmem>>, vector<256x1024xbf16>
    %cst_11 = arith.constant dense<0.000000e+00> : vector<32x1024xf32>
    %15 = tpu.matmul %13, %14, %cst_11 {dimension_numbers = #tpu.dot_dimension_numbers<[1], [0], [0], [1], [0, 0, 1, 1], [], []>} : vector<32x256xbf16>, vector<256x1024xbf16>, vector<32x1024xf32> -> vector<32x1024xf32>
    %c0_12 = arith.constant 0 : index
    %c0_13 = arith.constant 0 : index
    %16 = vector.load %arg6[%c0_12, %c0_13] : memref<32x1xf32, #tpu.memory_space<vmem>>, vector<32x1xf32>
    %17 = vector.broadcast %16 : vector<32x1xf32> to vector<32x1024xf32>
    %18 = arith.mulf %15, %17 : vector<32x1024xf32>
    %c0_14 = arith.constant 0 : index
    %c0_15 = arith.constant 0 : index
    %19 = vector.load %arg7[%c0_14, %c0_15] : memref<32x1xf32, #tpu.memory_space<vmem>>, vector<32x1xf32>
    %20 = vector.broadcast %19 : vector<32x1xf32> to vector<32x1024xf32>
    %21 = arith.addf %18, %20 : vector<32x1024xf32>
    %cst_16 = arith.constant 0.000000e+00 : f32
    %22 = vector.broadcast %cst_16 : f32 to vector<32x1024xf32>
    %23 = arith.maximumf %21, %22 : vector<32x1024xf32>
    %c0_17 = arith.constant 0 : index
    %c0_18 = arith.constant 0 : index
    %24 = vector.load %arg8[%c0_17, %c0_18] : memref<64x32xbf16, #tpu.memory_space<vmem>>, vector<64x32xbf16>
    %25 = arith.truncf %23 : vector<32x1024xf32> to vector<32x1024xbf16>
    %cst_19 = arith.constant dense<0.000000e+00> : vector<64x1024xf32>
    %26 = tpu.matmul %24, %25, %cst_19 {dimension_numbers = #tpu.dot_dimension_numbers<[1], [0], [0], [1], [0, 0, 1, 1], [], []>} : vector<64x32xbf16>, vector<32x1024xbf16>, vector<64x1024xf32> -> vector<64x1024xf32>
    %c0_20 = arith.constant 0 : index
    %c0_21 = arith.constant 0 : index
    %27 = vector.load %arg9[%c0_20, %c0_21] : memref<64x1xf32, #tpu.memory_space<vmem>>, vector<64x1xf32>
    %28 = vector.broadcast %27 : vector<64x1xf32> to vector<64x1024xf32>
    %29 = arith.mulf %26, %28 : vector<64x1024xf32>
    %c0_22 = arith.constant 0 : index
    %c0_23 = arith.constant 0 : index
    %30 = vector.load %arg10[%c0_22, %c0_23] : memref<64x1xf32, #tpu.memory_space<vmem>>, vector<64x1xf32>
    %31 = vector.broadcast %30 : vector<64x1xf32> to vector<64x1024xf32>
    %32 = arith.addf %29, %31 : vector<64x1024xf32>
    %cst_24 = arith.constant 0.000000e+00 : f32
    %33 = vector.broadcast %cst_24 : f32 to vector<64x1024xf32>
    %34 = arith.maximumf %32, %33 : vector<64x1024xf32>
    %c0_25 = arith.constant 0 : index
    %c0_26 = arith.constant 0 : index
    %c0_27 = arith.constant 0 : index
    %35 = vector.load %arg11[%c0_25, %c0_26, %c0_27] : memref<1x64x1024xf32, #tpu.memory_space<vmem>>, vector<1x64x1024xf32>
    %36 = vector.shape_cast %35 : vector<1x64x1024xf32> to vector<64x1024xf32>
    %37 = vector.shape_cast %34 : vector<64x1024xf32> to vector<1x64x1024xf32>
    tpu.vector_store %arg11[%c0_25, %c0_26, %c0_27], %37 {strides = array<i32>} : memref<1x64x1024xf32, #tpu.memory_space<vmem>>, vector<1x64x1024xf32>,
    return
  }
  func.func @transform_0(%arg0: i32) -> (i32, i32, i32) {
    %c0_i32 = arith.constant 0 : i32
    %c0_i32_0 = arith.constant 0 : i32
    %c0_i32_1 = arith.constant 0 : i32
    return %arg0, %c0_i32, %c0_i32_0 : i32, i32, i32
  }
  func.func @transform_1(%arg0: i32) -> (i32, i32) {
    %c0_i32 = arith.constant 0 : i32
    %c0_i32_0 = arith.constant 0 : i32
    %c0_i32_1 = arith.constant 0 : i32
    return %c0_i32, %c0_i32_0 : i32, i32
  }
  func.func @transform_2(%arg0: i32) -> (i32, i32) {
    %c0_i32 = arith.constant 0 : i32
    %c0_i32_0 = arith.constant 0 : i32
    %c0_i32_1 = arith.constant 0 : i32
    return %c0_i32, %c0_i32_0 : i32, i32
  }
  func.func @transform_3(%arg0: i32) -> (i32, i32) {
    %c0_i32 = arith.constant 0 : i32
    %c0_i32_0 = arith.constant 0 : i32
    %c0_i32_1 = arith.constant 0 : i32
    return %c0_i32, %c0_i32_0 : i32, i32
  }
  func.func @transform_4(%arg0: i32) -> (i32, i32) {
    %c0_i32 = arith.constant 0 : i32
    %c0_i32_0 = arith.constant 0 : i32
    %c0_i32_1 = arith.constant 0 : i32
    return %c0_i32, %c0_i32_0 : i32, i32
  }
  func.func @transform_5(%arg0: i32) -> (i32, i32) {
    %c0_i32 = arith.constant 0 : i32
    %c0_i32_0 = arith.constant 0 : i32
    %c0_i32_1 = arith.constant 0 : i32
    return %c0_i32, %c0_i32_0 : i32, i32
  }
  func.func @transform_6(%arg0: i32) -> (i32, i32) {
    %c0_i32 = arith.constant 0 : i32
    %c0_i32_0 = arith.constant 0 : i32
    %c0_i32_1 = arith.constant 0 : i32
    return %c0_i32, %c0_i32_0 : i32, i32
  }
  func.func @transform_7(%arg0: i32) -> (i32, i32) {
    %c0_i32 = arith.constant 0 : i32
    %c0_i32_0 = arith.constant 0 : i32
    %c0_i32_1 = arith.constant 0 : i32
    return %c0_i32, %c0_i32_0 : i32, i32
  }
  func.func @transform_8(%arg0: i32) -> (i32, i32) {
    %c0_i32 = arith.constant 0 : i32
    %c0_i32_0 = arith.constant 0 : i32
    %c0_i32_1 = arith.constant 0 : i32
    return %c0_i32, %c0_i32_0 : i32, i32
  }
  func.func @transform_9(%arg0: i32) -> (i32, i32) {
    %c0_i32 = arith.constant 0 : i32
    %c0_i32_0 = arith.constant 0 : i32
    %c0_i32_1 = arith.constant 0 : i32
    return %c0_i32, %c0_i32_0 : i32, i32
  }
  func.func @transform_10(%arg0: i32) -> (i32, i32, i32) {
    %c0_i32 = arith.constant 0 : i32
    %c0_i32_0 = arith.constant 0 : i32
    %c0_i32_1 = arith.constant 0 : i32
    return %arg0, %c0_i32, %c0_i32_0 : i32, i32, i32
  }
}

</mosaic_0001>

<llo_original>
// kernel: decoder_block_forward.1
$region0: #{decoder_block_forward.1}
  #allocation0 [shape = 'u32[]', space=smem, size = 0x4, offset = 0x4, fixed_abs, tag = 'smem constant byte address 0x4 - core index']
  #allocation1 [shape = 'u32[144,128]{1,0:T(1,128)}', space=vmem, size = 0x12000, scoped, tag = 'internal scratch']
  %s0 = inlined_call_operand.vmem [shape: f32[2,128,256], index: 0, kind: input, shape index: {}]
  %s1 = inlined_call_operand.vmem [shape: bf16[32,128], index: 1, kind: input, shape index: {}]
  %s2 = inlined_call_operand.vmem [shape: f32[32,1], index: 2, kind: input, shape index: {}]
  %s3 = inlined_call_operand.vmem [shape: f32[32,1], index: 3, kind: input, shape index: {}]
  %s4 = inlined_call_operand.vmem [shape: bf16[256,1024], index: 4, kind: input, shape index: {}]
  %s5 = inlined_call_operand.vmem [shape: f32[32,1], index: 5, kind: input, shape index: {}]
  %s6 = inlined_call_operand.vmem [shape: f32[32,1], index: 6, kind: input, shape index: {}]
  %s7 = inlined_call_operand.vmem [shape: bf16[64,32], index: 7, kind: input, shape index: {}]
  %s8 = inlined_call_operand.vmem [shape: f32[64,1], index: 8, kind: input, shape index: {}]
  %s9 = inlined_call_operand.vmem [shape: f32[64,1], index: 9, kind: input, shape index: {}]
  %s10 = inlined_call_operand.vmem [shape: f32[2,64,1024], index: 10, kind: output, shape index: {}]
  %s11 = sld [smem:[#allocation0]]
  $region73: #{decoder_block_forward.1} parent=0
    _
  %s13 = ssub.s32 1, %s11
  %s14 = scalar_select 0, %s13, %s11
  loop: start=0, step=1, limit=4
  $region2: #{decoder_block_forward.1} parent=0 // loop_pre_header
    _
  $region3: #{decoder_block_forward.1} parent=0 // loop_header
    %s16 = sphi 0, %s20
    %p17 = scmp.ge.s32.totalorder %s16, 4
    %s26 = sphi 0, %s28
    %s29 = sphi 0, %s26
    %s30 = sphi 0, %s29
    %s46 = sphi 0, %s30
    %s50 = sphi 0, %s50
    %s52 = sphi 0, %s50
    %s53 = sphi 0, %s52
    %s67 = sphi 0, %s53
    %s71 = sphi 0, %s71
    %s73 = sphi 0, %s71
    %s74 = sphi 0, %s73
    %s88 = sphi 0, %s74
    %s92 = sphi 0, %s92
    %s94 = sphi 0, %s92
    %s95 = sphi 0, %s94
    %s109 = sphi 0, %s95
    %s113 = sphi 0, %s113
    %s115 = sphi 0, %s113
    %s116 = sphi 0, %s115
    %s130 = sphi 0, %s116
    %s134 = sphi 0, %s134
    %s136 = sphi 0, %s134
    %s137 = sphi 0, %s136
    %s151 = sphi 0, %s137
    %s155 = sphi 0, %s155
    %s157 = sphi 0, %s155
    %s158 = sphi 0, %s157
    %s172 = sphi 0, %s158
    %s176 = sphi 0, %s176
    %s178 = sphi 0, %s176
    %s179 = sphi 0, %s178
    %s193 = sphi 0, %s179
    %s197 = sphi 0, %s197
    %s199 = sphi 0, %s197
    %s200 = sphi 0, %s199
    %s214 = sphi 0, %s200
    %s218 = sphi 0, %s218
    %s220 = sphi 0, %s218
    %s221 = sphi 0, %s220
    %s235 = sphi 0, %s221
    %s241 = sphi 0, %s243
    %s244 = sphi 0, %s241
    %s245 = sphi 0, %s244
    %s261 = sphi 0, %s245
  $region4: #{decoder_block_forward.1} parent=0 // loop_header_branch
    %19 = sbr.rel (%p17) target = $region8
  $region5: #{decoder_block_forward.1} parent=0 // loop_body
    %s21 = ssub.s32 %s16, 1
    %s22 = ssub.s32 %s16, 2
    %s23 = sadd.s32 %s16, 1
    %s24 = ssub.s32 %s16, %s23
    %p25 = scmp.eq.s32.totalorder %s24, 0
    %s27 = sadd.s32 %s26, 1
    %s28 = scalar_select %p25, %s26, %s27
    %p31 = pneg %p25
    %p32 = scmp.eq.s32.totalorder %s16, 1
    %p33 = por %p31, %p32
    %p34 = scmp.ne.s32.totalorder %s26, %s29
    %p35 = scmp.eq.s32.totalorder %s16, 0
    %p36 = por %p34, %p35
    %p37 = scmp.ne.s32.totalorder %s26, %s29
    %p38 = scmp.eq.s32.totalorder %s21, 1
    %p39 = por %p37, %p38
    %p40 = scmp.ne.s32.totalorder %s29, %s30
    %p41 = scmp.eq.s32.totalorder %s21, 0
    %p42 = por %p40, %p41
    %p43 = scmp.ne.s32.totalorder %s29, %s30
    %p44 = scmp.eq.s32.totalorder %s22, 1
    %p45 = por %p43, %p44
    %p47 = scmp.ne.s32.totalorder %s30, %s46
    %p48 = scmp.eq.s32.totalorder %s22, 0
    %p49 = por %p47, %p48
    %s51 = sadd.s32 %s50, 1
    %p54 = scmp.eq.s32.totalorder %s16, 1
    %p55 = scmp.ne.s32.totalorder %s50, %s52
    %p56 = scmp.eq.s32.totalorder %s16, 0
    %p57 = por %p55, %p56
    %p58 = scmp.ne.s32.totalorder %s50, %s52
    %p59 = scmp.eq.s32.totalorder %s21, 1
    %p60 = por %p58, %p59
    %p61 = scmp.ne.s32.totalorder %s52, %s53
    %p62 = scmp.eq.s32.totalorder %s21, 0
    %p63 = por %p61, %p62
    %p64 = scmp.ne.s32.totalorder %s52, %s53
    %p65 = scmp.eq.s32.totalorder %s22, 1
    %p66 = por %p64, %p65
    %p68 = scmp.ne.s32.totalorder %s53, %s67
    %p69 = scmp.eq.s32.totalorder %s22, 0
    %p70 = por %p68, %p69
    %s72 = sadd.s32 %s71, 1
    %p75 = scmp.eq.s32.totalorder %s16, 1
    %p76 = scmp.ne.s32.totalorder %s71, %s73
    %p77 = scmp.eq.s32.totalorder %s16, 0
    %p78 = por %p76, %p77
    %p79 = scmp.ne.s32.totalorder %s71, %s73
    %p80 = scmp.eq.s32.totalorder %s21, 1
    %p81 = por %p79, %p80
    %p82 = scmp.ne.s32.totalorder %s73, %s74
    %p83 = scmp.eq.s32.totalorder %s21, 0
    %p84 = por %p82, %p83
    %p85 = scmp.ne.s32.totalorder %s73, %s74
    %p86 = scmp.eq.s32.totalorder %s22, 1
    %p87 = por %p85, %p86
    %p89 = scmp.ne.s32.totalorder %s74, %s88
    %p90 = scmp.eq.s32.totalorder %s22, 0
    %p91 = por %p89, %p90
    %s93 = sadd.s32 %s92, 1
    %p96 = scmp.eq.s32.totalorder %s16, 1
    %p97 = scmp.ne.s32.totalorder %s92, %s94
    %p98 = scmp.eq.s32.totalorder %s16, 0
    %p99 = por %p97, %p98
    %p100 = scmp.ne.s32.totalorder %s92, %s94
    %p101 = scmp.eq.s32.totalorder %s21, 1
    %p102 = por %p100, %p101
    %p103 = scmp.ne.s32.totalorder %s94, %s95
    %p104 = scmp.eq.s32.totalorder %s21, 0
    %p105 = por %p103, %p104
    %p106 = scmp.ne.s32.totalorder %s94, %s95
    %p107 = scmp.eq.s32.totalorder %s22, 1
    %p108 = por %p106, %p107
    %p110 = scmp.ne.s32.totalorder %s95, %s109
    %p111 = scmp.eq.s32.totalorder %s22, 0
    %p112 = por %p110, %p111
    %s114 = sadd.s32 %s113, 1
    %p117 = scmp.eq.s32.totalorder %s16, 1
    %p118 = scmp.ne.s32.totalorder %s113, %s115
    %p119 = scmp.eq.s32.totalorder %s16, 0
    %p120 = por %p118, %p119
    %p121 = scmp.ne.s32.totalorder %s113, %s115
    %p122 = scmp.eq.s32.totalorder %s21, 1
    %p123 = por %p121, %p122
    %p124 = scmp.ne.s32.totalorder %s115, %s116
    %p125 = scmp.eq.s32.totalorder %s21, 0
    %p126 = por %p124, %p125
    %p127 = scmp.ne.s32.totalorder %s115, %s116
    %p128 = scmp.eq.s32.totalorder %s22, 1
    %p129 = por %p127, %p128
    %p131 = scmp.ne.s32.totalorder %s116, %s130
    %p132 = scmp.eq.s32.totalorder %s22, 0
    %p133 = por %p131, %p132
    %s135 = sadd.s32 %s134, 1
    %p138 = scmp.eq.s32.totalorder %s16, 1
    %p139 = scmp.ne.s32.totalorder %s134, %s136
    %p140 = scmp.eq.s32.totalorder %s16, 0
    %p141 = por %p139, %p140
    %p142 = scmp.ne.s32.totalorder %s134, %s136
    %p143 = scmp.eq.s32.totalorder %s21, 1
    %p144 = por %p142, %p143
    %p145 = scmp.ne.s32.totalorder %s136, %s137
    %p146 = scmp.eq.s32.totalorder %s21, 0
    %p147 = por %p145, %p146
    %p148 = scmp.ne.s32.totalorder %s136, %s137
    %p149 = scmp.eq.s32.totalorder %s22, 1
    %p150 = por %p148, %p149
    %p152 = scmp.ne.s32.totalorder %s137, %s151
    %p153 = scmp.eq.s32.totalorder %s22, 0
    %p154 = por %p152, %p153
    %s156 = sadd.s32 %s155, 1
    %p159 = scmp.eq.s32.totalorder %s16, 1
    %p160 = scmp.ne.s32.totalorder %s155, %s157
    %p161 = scmp.eq.s32.totalorder %s16, 0
    %p162 = por %p160, %p161
    %p163 = scmp.ne.s32.totalorder %s155, %s157
    %p164 = scmp.eq.s32.totalorder %s21, 1
    %p165 = por %p163, %p164
    %p166 = scmp.ne.s32.totalorder %s157, %s158
    %p167 = scmp.eq.s32.totalorder %s21, 0
    %p168 = por %p166, %p167
    %p169 = scmp.ne.s32.totalorder %s157, %s158
    %p170 = scmp.eq.s32.totalorder %s22, 1
    %p171 = por %p169, %p170
    %p173 = scmp.ne.s32.totalorder %s158, %s172
    %p174 = scmp.eq.s32.totalorder %s22, 0
    %p175 = por %p173, %p174
    %s177 = sadd.s32 %s176, 1
    %p180 = scmp.eq.s32.totalorder %s16, 1
    %p181 = scmp.ne.s32.totalorder %s176, %s178
    %p182 = scmp.eq.s32.totalorder %s16, 0
    %p183 = por %p181, %p182
    %p184 = scmp.ne.s32.totalorder %s176, %s178
    %p185 = scmp.eq.s32.totalorder %s21, 1
    %p186 = por %p184, %p185
    %p187 = scmp.ne.s32.totalorder %s178, %s179
    %p188 = scmp.eq.s32.totalorder %s21, 0
    %p189 = por %p187, %p188
    %p190 = scmp.ne.s32.totalorder %s178, %s179
    %p191 = scmp.eq.s32.totalorder %s22, 1
    %p192 = por %p190, %p191
    %p194 = scmp.ne.s32.totalorder %s179, %s193
    %p195 = scmp.eq.s32.totalorder %s22, 0
    %p196 = por %p194, %p195
    %s198 = sadd.s32 %s197, 1
    %p201 = scmp.eq.s32.totalorder %s16, 1
    %p202 = scmp.ne.s32.totalorder %s197, %s199
    %p203 = scmp.eq.s32.totalorder %s16, 0
    %p204 = por %p202, %p203
    %p205 = scmp.ne.s32.totalorder %s197, %s199
    %p206 = scmp.eq.s32.totalorder %s21, 1
    %p207 = por %p205, %p206
    %p208 = scmp.ne.s32.totalorder %s199, %s200
    %p209 = scmp.eq.s32.totalorder %s21, 0
    %p210 = por %p208, %p209
    %p211 = scmp.ne.s32.totalorder %s199, %s200
    %p212 = scmp.eq.s32.totalorder %s22, 1
    %p213 = por %p211, %p212
    %p215 = scmp.ne.s32.totalorder %s200, %s214
    %p216 = scmp.eq.s32.totalorder %s22, 0
    %p217 = por %p215, %p216
    %s219 = sadd.s32 %s218, 1
    %p222 = scmp.eq.s32.totalorder %s16, 1
    %p223 = scmp.ne.s32.totalorder %s218, %s220
    %p224 = scmp.eq.s32.totalorder %s16, 0
    %p225 = por %p223, %p224
    %p226 = scmp.ne.s32.totalorder %s218, %s220
    %p227 = scmp.eq.s32.totalorder %s21, 1
    %p228 = por %p226, %p227
    %p229 = scmp.ne.s32.totalorder %s220, %s221
    %p230 = scmp.eq.s32.totalorder %s21, 0
    %p231 = por %p229, %p230
    %p232 = scmp.ne.s32.totalorder %s220, %s221
    %p233 = scmp.eq.s32.totalorder %s22, 1
    %p234 = por %p232, %p233
    %p236 = scmp.ne.s32.totalorder %s221, %s235
    %p237 = scmp.eq.s32.totalorder %s22, 0
    %p238 = por %p236, %p237
    %s239 = ssub.s32 %s16, %s23
    %p240 = scmp.eq.s32.totalorder %s239, 0
    %s242 = sadd.s32 %s241, 1
    %s243 = scalar_select %p240, %s241, %s242
    %p246 = pneg %p240
    %p247 = scmp.eq.s32.totalorder %s16, 1
    %p248 = por %p246, %p247
    %p249 = scmp.ne.s32.totalorder %s241, %s244
    %p250 = scmp.eq.s32.totalorder %s16, 0
    %p251 = por %p249, %p250
    %p252 = scmp.ne.s32.totalorder %s241, %s244
    %p253 = scmp.eq.s32.totalorder %s21, 1
    %p254 = por %p252, %p253
    %p255 = scmp.ne.s32.totalorder %s244, %s245
    %p256 = scmp.eq.s32.totalorder %s21, 0
    %p257 = por %p255, %p256
    %p258 = scmp.ne.s32.totalorder %s244, %s245
    %p259 = scmp.eq.s32.totalorder %s22, 1
    %p260 = por %p258, %p259
    %p262 = scmp.ne.s32.totalorder %s245, %s261
    %p263 = scmp.eq.s32.totalorder %s22, 0
    %p264 = por %p262, %p263
    %p265 = scmp.le.s32.totalorder 1, %s16
    %p266 = scmp.lt.s32.totalorder %s16, 3
    %p267 = pnand %p265, %p266
    %p268 = pneg %p267
    // Predicated region
    $region9: #{decoder_block_forward.1} parent=5 // pred_check
      _
    $region10: #{decoder_block_forward.1} parent=5 // pred_check_branch
      %270 = sbr.rel (%p267) target = $region12
    $region11: #{decoder_block_forward.1} parent=5 // pred_region
      %s271 = ssub.s32 %s16, 1
      // Predicated region
      $region13: #{decoder_block_forward.1} parent=11 // pred_check
        %p272 = pneg %p63
      $region14: #{decoder_block_forward.1} parent=11 // pred_check_branch
        %274 = sbr.rel (%p272) target = $region16
      $region15: #{decoder_block_forward.1} parent=11 // pred_region
        _
      $region16: #{decoder_block_forward.1} parent=11 // pred_fallthru
        _
      // Predicated region
      $region17: #{decoder_block_forward.1} parent=11 // pred_check
        %p275 = pneg %p84
      $region18: #{decoder_block_forward.1} parent=11 // pred_check_branch
        %277 = sbr.rel (%p275) target = $region20
      $region19: #{decoder_block_forward.1} parent=11 // pred_region
        _
      $region20: #{decoder_block_forward.1} parent=11 // pred_fallthru
        _
      // Predicated region
      $region21: #{decoder_block_forward.1} parent=11 // pred_check
        %p278 = pneg %p105
      $region22: #{decoder_block_forward.1} parent=11 // pred_check_branch
        %280 = sbr.rel (%p278) target = $region24
      $region23: #{decoder_block_forward.1} parent=11 // pred_region
        _
      $region24: #{decoder_block_forward.1} parent=11 // pred_fallthru
        _
      // Predicated region
      $region25: #{decoder_block_forward.1} parent=11 // pred_check
        %p281 = pneg %p126
      $region26: #{decoder_block_forward.1} parent=11 // pred_check_branch
        %283 = sbr.rel (%p281) target = $region28
      $region27: #{decoder_block_forward.1} parent=11 // pred_region
        _
      $region28: #{decoder_block_forward.1} parent=11 // pred_fallthru
        _
      // Predicated region
      $region29: #{decoder_block_forward.1} parent=11 // pred_check
        %p284 = pneg %p147
      $region30: #{decoder_block_forward.1} parent=11 // pred_check_branch
        %286 = sbr.rel (%p284) target = $region32
      $region31: #{decoder_block_forward.1} parent=11 // pred_region
        _
      $region32: #{decoder_block_forward.1} parent=11 // pred_fallthru
        _
      // Predicated region
      $region33: #{decoder_block_forward.1} parent=11 // pred_check
        %p287 = pneg %p168
      $region34: #{decoder_block_forward.1} parent=11 // pred_check_branch
        %289 = sbr.rel (%p287) target = $region36
      $region35: #{decoder_block_forward.1} parent=11 // pred_region
        _
      $region36: #{decoder_block_forward.1} parent=11 // pred_fallthru
        _
      // Predicated region
      $region37: #{decoder_block_forward.1} parent=11 // pred_check
        %p290 = pneg %p189
      $region38: #{decoder_block_forward.1} parent=11 // pred_check_branch
        %292 = sbr.rel (%p290) target = $region40
      $region39: #{decoder_block_forward.1} parent=11 // pred_region
        _
      $region40: #{decoder_block_forward.1} parent=11 // pred_fallthru
        _
      // Predicated region
      $region41: #{decoder_block_forward.1} parent=11 // pred_check
        %p293 = pneg %p210
      $region42: #{decoder_block_forward.1} parent=11 // pred_check_branch
        %295 = sbr.rel (%p293) target = $region44
      $region43: #{decoder_block_forward.1} parent=11 // pred_region
        _
      $region44: #{decoder_block_forward.1} parent=11 // pred_fallthru
        _
      // Predicated region
      $region45: #{decoder_block_forward.1} parent=11 // pred_check
        %p296 = pneg %p231
      $region46: #{decoder_block_forward.1} parent=11 // pred_check_branch
        %298 = sbr.rel (%p296) target = $region48
      $region47: #{decoder_block_forward.1} parent=11 // pred_region
        _
      $region48: #{decoder_block_forward.1} parent=11 // pred_fallthru
        _
    $region12: #{decoder_block_forward.1} parent=5 // pred_fallthru
      _
    %p299 = scmp.lt.s32.totalorder %s16, 2
    // Predicated region
    $region49: #{decoder_block_forward.1} parent=5 // pred_check
      %p300 = pneg %p299
    $region50: #{decoder_block_forward.1} parent=5 // pred_check_branch
      %302 = sbr.rel (%p300) target = $region52
    $region51: #{decoder_block_forward.1} parent=5 // pred_region
      // Predicated region
      $region53: #{decoder_block_forward.1} parent=51 // pred_check
        %p303 = pneg %p36
      $region54: #{decoder_block_forward.1} parent=51 // pred_check_branch
        %305 = sbr.rel (%p303) target = $region56
      $region55: #{decoder_block_forward.1} parent=51 // pred_region
        %p306 = scmp.lt.s32.totalorder %s16, 1
        %s307 = scalar_select %p306, %s16, 1
        %s308 = smul.addr %s307, 32
        %s309 = smul.addr %s308, 8
        %s310 = scalar_lea.vmem %s0, %s309
      $region56: #{decoder_block_forward.1} parent=51 // pred_fallthru
        _
    $region52: #{decoder_block_forward.1} parent=5 // pred_fallthru
      _
    %p311 = scmp.le.s32.totalorder 1, %s16
    %p312 = scmp.lt.s32.totalorder %s16, 3
    %p313 = pnand %p311, %p312
    %p314 = pneg %p313
    // Predicated region
    $region57: #{decoder_block_forward.1} parent=5 // pred_check
      _
    $region58: #{decoder_block_forward.1} parent=5 // pred_check_branch
      %316 = sbr.rel (%p313) target = $region60
    $region59: #{decoder_block_forward.1} parent=5 // pred_region
      %s317 = ssub.s32 %s16, 1
      %p318 = scmp.lt.s32.totalorder %s21, 1
      %s319 = scalar_select %p318, %s21, 1
      %s320 = smul.addr %s319, 32
      %s321 = smul.addr %s320, 8
      %s322 = scalar_lea.vmem %s0, %s321
      %p323 = pneg %p42
      %p324 = pneg %p39
      %p325 = pneg %p63
      %p326 = pneg %p60
      %p327 = pneg %p84
      %p328 = pneg %p81
      %p329 = pneg %p105
      %p330 = pneg %p102
      %p331 = pneg %p126
      %p332 = pneg %p123
      %p333 = pneg %p147
      %p334 = pneg %p144
      %p335 = pneg %p168
      %p336 = pneg %p165
      %p337 = pneg %p189
      %p338 = pneg %p186
      %p339 = pneg %p210
      %p340 = pneg %p207
      %p341 = pneg %p231
      %p342 = pneg %p228
      %p343 = pneg %p257
      %p344 = pneg %p254
      %p345 = scmp.lt.s32.totalorder %s21, 1
      %s346 = scalar_select %p345, %s21, 1
      %s347 = smul.addr %s346, 64
      %s348 = smul.addr %s347, 8
      %s349 = scalar_lea.vmem %s10, %s348
      %p350 = scmp.lt.s32.totalorder %s21, 1
      %s351 = scalar_select %p350, %s21, 1
      %s352 = smul.addr %s351, 32
      %s353 = smul.addr %s352, 8
      %s354 = scalar_lea.vmem %s0, %s353
      %p355 = scmp.lt.s32.totalorder %s21, 1
      %s356 = scalar_select %p355, %s21, 1
      %s357 = smul.addr %s356, 64
      %s358 = smul.addr %s357, 8
      %s359 = scalar_lea.vmem %s10, %s358
      %v361 = vld [vmem:[%s354] sm:$0xff]
      %v362 = vld [vmem:[%s354 + $0x8] sm:$0xff]
      %v363 = vld [vmem:[%s354 + $0x10] sm:$0xff]
      %v364 = vld [vmem:[%s354 + $0x18] sm:$0xff]
      %v365 = vld [vmem:[%s354 + $0x20] sm:$0xff]
      %v366 = vld [vmem:[%s354 + $0x28] sm:$0xff]
      %v367 = vld [vmem:[%s354 + $0x30] sm:$0xff]
      %v368 = vld [vmem:[%s354 + $0x38] sm:$0xff]
      %v369 = vld [vmem:[%s354 + $0x40] sm:$0xff]
      %v370 = vld [vmem:[%s354 + $0x48] sm:$0xff]
      %v371 = vld [vmem:[%s354 + $0x50] sm:$0xff]
      %v372 = vld [vmem:[%s354 + $0x58] sm:$0xff]
      %v373 = vld [vmem:[%s354 + $0x60] sm:$0xff]
      %v374 = vld [vmem:[%s354 + $0x68] sm:$0xff]
      %v375 = vld [vmem:[%s354 + $0x70] sm:$0xff]
      %v376 = vld [vmem:[%s354 + $0x78] sm:$0xff]
      %v377 = vld [vmem:[%s354 + $0x80] sm:$0xff]
      %v378 = vld [vmem:[%s354 + $0x88] sm:$0xff]
      %v379 = vld [vmem:[%s354 + $0x90] sm:$0xff]
      %v380 = vld [vmem:[%s354 + $0x98] sm:$0xff]
      %v381 = vld [vmem:[%s354 + $0xa0] sm:$0xff]
      %v382 = vld [vmem:[%s354 + $0xa8] sm:$0xff]
      %v383 = vld [vmem:[%s354 + $0xb0] sm:$0xff]
      %v384 = vld [vmem:[%s354 + $0xb8] sm:$0xff]
      %v385 = vld [vmem:[%s354 + $0xc0] sm:$0xff]
      %v386 = vld [vmem:[%s354 + $0xc8] sm:$0xff]
      %v387 = vld [vmem:[%s354 + $0xd0] sm:$0xff]
      %v388 = vld [vmem:[%s354 + $0xd8] sm:$0xff]
      %v389 = vld [vmem:[%s354 + $0xe0] sm:$0xff]
      %v390 = vld [vmem:[%s354 + $0xe8] sm:$0xff]
      %v391 = vld [vmem:[%s354 + $0xf0] sm:$0xff]
      %v392 = vld [vmem:[%s354 + $0xf8] sm:$0xff]
      %v393 = vpack.c.bf16 %v363, %v361
      %v394 = vpack.c.bf16 %v364, %v362
      %v395 = vpack.c.bf16 %v367, %v365
      %v396 = vpack.c.bf16 %v368, %v366
      %v397 = vpack.c.bf16 %v371, %v369
      %v398 = vpack.c.bf16 %v372, %v370
      %v399 = vpack.c.bf16 %v375, %v373
      %v400 = vpack.c.bf16 %v376, %v374
      %v401 = vpack.c.bf16 %v379, %v377
      %v402 = vpack.c.bf16 %v380, %v378
      %v403 = vpack.c.bf16 %v383, %v381
      %v404 = vpack.c.bf16 %v384, %v382
      %v405 = vpack.c.bf16 %v387, %v385
      %v406 = vpack.c.bf16 %v388, %v386
      %v407 = vpack.c.bf16 %v391, %v389
      %v408 = vpack.c.bf16 %v392, %v390
      %v409 = vld [vmem:[%s1] sm:$0xf]
      %v410 = vld [vmem:[%s1 + $0x4] sm:$0xf]
      %v411 = vld [vmem:[%s1 + $0x8] sm:$0xf]
      %v412 = vld [vmem:[%s1 + $0xc] sm:$0xf]
      %v417 = vunpack.c.l.b16 %v409
      %v418 = vunpack.c.l.b16 %v410
      %v419 = vunpack.c.l.b16 %v411
      %v420 = vunpack.c.l.b16 %v412
      %v421 = vpack.c.b16 %v418, %v417
      %v422 = vpack.c.b16 %v420, %v419
      %425 = vmatprep.subr.bf16.mxu0 %v408
      %426 = vmatpush1.bf16.msra.mxu0 %v407
      %427 = vmatprep.subr.bf16.mxu0 %v406
      %428 = vmatpush1.bf16.msra.mxu0 %v405
      %429 = vmatprep.subr.bf16.mxu0 %v404
      %430 = vmatpush1.bf16.msra.mxu0 %v403
      %431 = vmatprep.subr.bf16.mxu0 %v402
      %432 = vmatpush1.bf16.msra.mxu0 %v401
      %433 = vmatprep.subr.bf16.mxu0 %v400
      %434 = vmatpush1.bf16.msra.mxu0 %v399
      %435 = vmatprep.subr.bf16.mxu0 %v398
      %436 = vmatpush1.bf16.msra.mxu0 %v397
      %437 = vmatprep.subr.bf16.mxu0 %v396
      %438 = vmatpush1.bf16.msra.mxu0 %v395
      %439 = vmatprep.subr.bf16.mxu0 %v394
      %440 = vmatpush1.bf16.msra.mxu0 %v393
      %441 = vmatprep.subr.bf16.mxu0 0
      %442 = vmatpush2.bf16.msra.mxu0 0
      %443 = vmatprep.subr.bf16.mxu0 0
      %444 = vmatpush2.bf16.msra.mxu0 0
      %445 = vmatprep.subr.bf16.mxu0 0
      %446 = vmatpush2.bf16.msra.mxu0 0
      %447 = vmatprep.subr.bf16.mxu0 0
      %448 = vmatpush2.bf16.msra.mxu0 0
      %449 = vmatprep.subr.bf16.mxu0 0
      %450 = vmatpush2.bf16.msra.mxu0 0
      %451 = vmatprep.subr.bf16.mxu0 0
      %452 = vmatpush2.bf16.msra.mxu0 0
      %453 = vmatprep.subr.bf16.mxu0 0
      %454 = vmatpush2.bf16.msra.mxu0 0
      %455 = vmatprep.subr.bf16.mxu0 0
      %456 = vmatpush2.bf16.msra.mxu0 0
      %457 = vmatprep.mubr.bf16.mxu0 0
      %458 = vmatmul.mubr.bf16.gmra.mxu0 %v421
      %v459 = vpop.f32.mrf.mxu0
      %v460 = vadd.f32 0.0, %v459
      %v461 = vpop.f32.mrf.mxu0
      %v462 = vadd.f32 0.0, %v461
      %v463 = vpop.f32.mrf.mxu0
      %v464 = vadd.f32 0.0, %v463
      %v465 = vpop.f32.mrf.mxu0
      %v466 = vadd.f32 0.0, %v465
      %467 = vmatprep.mubr.bf16.mxu0 0
      %468 = vmatmul.mubr.bf16.gmra.mxu0 %v422
      %v469 = vpop.f32.mrf.mxu0
      %v470 = vadd.f32 0.0, %v469
      %v471 = vpop.f32.mrf.mxu0
      %v472 = vadd.f32 0.0, %v471
      %v473 = vpop.f32.mrf.mxu0
      %v474 = vadd.f32 0.0, %v473
      %v475 = vpop.f32.mrf.mxu0
      %v476 = vadd.f32 0.0, %v475
      %477 = vdwg.mxu0
      %v478 = vld [vmem:[%s2] sm:$0xff]
      %v479 = vld [vmem:[%s2 + $0x8] sm:$0xff]
      %v480 = vld [vmem:[%s2 + $0x10] sm:$0xff]
      %v481 = vld [vmem:[%s2 + $0x18] sm:$0xff]
      %483 = vset.pattern.permute.xlu0 0
      %484 = vperm.xlu0 %483, %v478
      %v485 = vpop.permute.xlu0 %484
      %488 = vset.pattern.permute.xlu0 0
      %489 = vperm.xlu0 %488, %v479
      %v490 = vpop.permute.xlu0 %489
      %493 = vset.pattern.permute.xlu0 0
      %494 = vperm.xlu0 %493, %v480
      %v495 = vpop.permute.xlu0 %494
      %498 = vset.pattern.permute.xlu0 0
      %499 = vperm.xlu0 %498, %v481
      %v500 = vpop.permute.xlu0 %499
      %v502 = vmul.f32 %v460, %v485
      %v503 = vmul.f32 %v462, %v485
      %v504 = vmul.f32 %v464, %v490
      %v505 = vmul.f32 %v466, %v490
      %v506 = vmul.f32 %v470, %v495
      %v507 = vmul.f32 %v472, %v495
      %v508 = vmul.f32 %v474, %v500
      %v509 = vmul.f32 %v476, %v500
      %v510 = vld [vmem:[%s3] sm:$0xff]
      %v511 = vld [vmem:[%s3 + $0x8] sm:$0xff]
      %v512 = vld [vmem:[%s3 + $0x10] sm:$0xff]
      %v513 = vld [vmem:[%s3 + $0x18] sm:$0xff]
      %515 = vset.pattern.permute.xlu0 0
      %516 = vperm.xlu0 %515, %v510
      %v517 = vpop.permute.xlu0 %516
      %520 = vset.pattern.permute.xlu0 0
      %521 = vperm.xlu0 %520, %v511
      %v522 = vpop.permute.xlu0 %521
      %525 = vset.pattern.permute.xlu0 0
      %526 = vperm.xlu0 %525, %v512
      %v527 = vpop.permute.xlu0 %526
      %530 = vset.pattern.permute.xlu0 0
      %531 = vperm.xlu0 %530, %v513
      %v532 = vpop.permute.xlu0 %531
      %v534 = vadd.f32 %v502, %v517
      %v535 = vadd.f32 %v503, %v517
      %v536 = vadd.f32 %v504, %v522
      %v537 = vadd.f32 %v505, %v522
      %v538 = vadd.f32 %v506, %v527
      %v539 = vadd.f32 %v507, %v527
      %v540 = vadd.f32 %v508, %v532
      %v541 = vadd.f32 %v509, %v532
      %v542 = vmax.f32 %v534, 0.0
      %v543 = vmax.f32 %v535, 0.0
      %v544 = vmax.f32 %v536, 0.0
      %v545 = vmax.f32 %v537, 0.0
      %v546 = vmax.f32 %v538, 0.0
      %v547 = vmax.f32 %v539, 0.0
      %v548 = vmax.f32 %v540, 0.0
      %v549 = vmax.f32 %v541, 0.0
      %v550 = vpack.c.bf16 %v544, %v542
      %v551 = vpack.c.bf16 %v545, %v543
      %v552 = vpack.c.bf16 %v548, %v546
      %v553 = vpack.c.bf16 %v549, %v547
      %v554 = vld [vmem:[%s4] sm:$0xff]
      %v555 = vld [vmem:[%s4 + $0x8] sm:$0xff]
      %v556 = vld [vmem:[%s4 + $0x10] sm:$0xff]
      %v557 = vld [vmem:[%s4 + $0x18] sm:$0xff]
      %v558 = vld [vmem:[%s4 + $0x20] sm:$0xff]
      %v559 = vld [vmem:[%s4 + $0x28] sm:$0xff]
      %v560 = vld [vmem:[%s4 + $0x30] sm:$0xff]
      %v561 = vld [vmem:[%s4 + $0x38] sm:$0xff]
      %v562 = vld [vmem:[%s4 + $0x40] sm:$0xff]
      %v563 = vld [vmem:[%s4 + $0x48] sm:$0xff]
      %v564 = vld [vmem:[%s4 + $0x50] sm:$0xff]
      %v565 = vld [vmem:[%s4 + $0x58] sm:$0xff]
      %v566 = vld [vmem:[%s4 + $0x60] sm:$0xff]
      %v567 = vld [vmem:[%s4 + $0x68] sm:$0xff]
      %v568 = vld [vmem:[%s4 + $0x70] sm:$0xff]
      %v569 = vld [vmem:[%s4 + $0x78] sm:$0xff]
      %v570 = vld [vmem:[%s4 + $0x80] sm:$0xff]
      %v571 = vld [vmem:[%s4 + $0x88] sm:$0xff]
      %v572 = vld [vmem:[%s4 + $0x90] sm:$0xff]
      %v573 = vld [vmem:[%s4 + $0x98] sm:$0xff]
      %v574 = vld [vmem:[%s4 + $0xa0] sm:$0xff]
      %v575 = vld [vmem:[%s4 + $0xa8] sm:$0xff]
      %v576 = vld [vmem:[%s4 + $0xb0] sm:$0xff]
      %v577 = vld [vmem:[%s4 + $0xb8] sm:$0xff]
      %v578 = vld [vmem:[%s4 + $0xc0] sm:$0xff]
      %v579 = vld [vmem:[%s4 + $0xc8] sm:$0xff]
      %v580 = vld [vmem:[%s4 + $0xd0] sm:$0xff]
      %v581 = vld [vmem:[%s4 + $0xd8] sm:$0xff]
      %v582 = vld [vmem:[%s4 + $0xe0] sm:$0xff]
      %v583 = vld [vmem:[%s4 + $0xe8] sm:$0xff]
      %v584 = vld [vmem:[%s4 + $0xf0] sm:$0xff]
      %v585 = vld [vmem:[%s4 + $0xf8] sm:$0xff]
      %v586 = vld [vmem:[%s4 + $0x100] sm:$0xff]
      %v587 = vld [vmem:[%s4 + $0x108] sm:$0xff]
      %v588 = vld [vmem:[%s4 + $0x110] sm:$0xff]
      %v589 = vld [vmem:[%s4 + $0x118] sm:$0xff]
      %v590 = vld [vmem:[%s4 + $0x120] sm:$0xff]
      %v591 = vld [vmem:[%s4 + $0x128] sm:$0xff]
      %v592 = vld [vmem:[%s4 + $0x130] sm:$0xff]
      %v593 = vld [vmem:[%s4 + $0x138] sm:$0xff]
      %v594 = vld [vmem:[%s4 + $0x140] sm:$0xff]
      %v595 = vld [vmem:[%s4 + $0x148] sm:$0xff]
      %v596 = vld [vmem:[%s4 + $0x150] sm:$0xff]
      %v597 = vld [vmem:[%s4 + $0x158] sm:$0xff]
      %v598 = vld [vmem:[%s4 + $0x160] sm:$0xff]
      %v599 = vld [vmem:[%s4 + $0x168] sm:$0xff]
      %v600 = vld [vmem:[%s4 + $0x170] sm:$0xff]
      %v601 = vld [vmem:[%s4 + $0x178] sm:$0xff]
      %v602 = vld [vmem:[%s4 + $0x180] sm:$0xff]
      %v603 = vld [vmem:[%s4 + $0x188] sm:$0xff]
      %v604 = vld [vmem:[%s4 + $0x190] sm:$0xff]
      %v605 = vld [vmem:[%s4 + $0x198] sm:$0xff]
      %v606 = vld [vmem:[%s4 + $0x1a0] sm:$0xff]
      %v607 = vld [vmem:[%s4 + $0x1a8] sm:$0xff]
      %v608 = vld [vmem:[%s4 + $0x1b0] sm:$0xff]
      %v609 = vld [vmem:[%s4 + $0x1b8] sm:$0xff]
      %v610 = vld [vmem:[%s4 + $0x1c0] sm:$0xff]
      %v611 = vld [vmem:[%s4 + $0x1c8] sm:$0xff]
      %v612 = vld [vmem:[%s4 + $0x1d0] sm:$0xff]
      %v613 = vld [vmem:[%s4 + $0x1d8] sm:$0xff]
      %v614 = vld [vmem:[%s4 + $0x1e0] sm:$0xff]
      %v615 = vld [vmem:[%s4 + $0x1e8] sm:$0xff]
      %v616 = vld [vmem:[%s4 + $0x1f0] sm:$0xff]
      %v617 = vld [vmem:[%s4 + $0x1f8] sm:$0xff]
      %v618 = vld [vmem:[%s4 + $0x200] sm:$0xff]
      %v619 = vld [vmem:[%s4 + $0x208] sm:$0xff]
      %v620 = vld [vmem:[%s4 + $0x210] sm:$0xff]
      %v621 = vld [vmem:[%s4 + $0x218] sm:$0xff]
      %v622 = vld [vmem:[%s4 + $0x220] sm:$0xff]
      %v623 = vld [vmem:[%s4 + $0x228] sm:$0xff]
      %v624 = vld [vmem:[%s4 + $0x230] sm:$0xff]
      %v625 = vld [vmem:[%s4 + $0x238] sm:$0xff]
      %v626 = vld [vmem:[%s4 + $0x240] sm:$0xff]
      %v627 = vld [vmem:[%s4 + $0x248] sm:$0xff]
      %v628 = vld [vmem:[%s4 + $0x250] sm:$0xff]
      %v629 = vld [vmem:[%s4 + $0x258] sm:$0xff]
      %v630 = vld [vmem:[%s4 + $0x260] sm:$0xff]
      %v631 = vld [vmem:[%s4 + $0x268] sm:$0xff]
      %v632 = vld [vmem:[%s4 + $0x270] sm:$0xff]
      %v633 = vld [vmem:[%s4 + $0x278] sm:$0xff]
      %v634 = vld [vmem:[%s4 + $0x280] sm:$0xff]
      %v635 = vld [vmem:[%s4 + $0x288] sm:$0xff]
      %v636 = vld [vmem:[%s4 + $0x290] sm:$0xff]
      %v637 = vld [vmem:[%s4 + $0x298] sm:$0xff]
      %v638 = vld [vmem:[%s4 + $0x2a0] sm:$0xff]
      %v639 = vld [vmem:[%s4 + $0x2a8] sm:$0xff]
      %v640 = vld [vmem:[%s4 + $0x2b0] sm:$0xff]
      %v641 = vld [vmem:[%s4 + $0x2b8] sm:$0xff]
      %v642 = vld [vmem:[%s4 + $0x2c0] sm:$0xff]
      %v643 = vld [vmem:[%s4 + $0x2c8] sm:$0xff]
      %v644 = vld [vmem:[%s4 + $0x2d0] sm:$0xff]
      %v645 = vld [vmem:[%s4 + $0x2d8] sm:$0xff]
      %v646 = vld [vmem:[%s4 + $0x2e0] sm:$0xff]
      %v647 = vld [vmem:[%s4 + $0x2e8] sm:$0xff]
      %v648 = vld [vmem:[%s4 + $0x2f0] sm:$0xff]
      %v649 = vld [vmem:[%s4 + $0x2f8] sm:$0xff]
      %v650 = vld [vmem:[%s4 + $0x300] sm:$0xff]
      %v651 = vld [vmem:[%s4 + $0x308] sm:$0xff]
      %v652 = vld [vmem:[%s4 + $0x310] sm:$0xff]
      %v653 = vld [vmem:[%s4 + $0x318] sm:$0xff]
      %v654 = vld [vmem:[%s4 + $0x320] sm:$0xff]
      %v655 = vld [vmem:[%s4 + $0x328] sm:$0xff]
      %v656 = vld [vmem:[%s4 + $0x330] sm:$0xff]
      %v657 = vld [vmem:[%s4 + $0x338] sm:$0xff]
      %v658 = vld [vmem:[%s4 + $0x340] sm:$0xff]
      %v659 = vld [vmem:[%s4 + $0x348] sm:$0xff]
      %v660 = vld [vmem:[%s4 + $0x350] sm:$0xff]
      %v661 = vld [vmem:[%s4 + $0x358] sm:$0xff]
      %v662 = vld [vmem:[%s4 + $0x360] sm:$0xff]
      %v663 = vld [vmem:[%s4 + $0x368] sm:$0xff]
      %v664 = vld [vmem:[%s4 + $0x370] sm:$0xff]
      %v665 = vld [vmem:[%s4 + $0x378] sm:$0xff]
      %v666 = vld [vmem:[%s4 + $0x380] sm:$0xff]
      %v667 = vld [vmem:[%s4 + $0x388] sm:$0xff]
      %v668 = vld [vmem:[%s4 + $0x390] sm:$0xff]
      %v669 = vld [vmem:[%s4 + $0x398] sm:$0xff]
      %v670 = vld [vmem:[%s4 + $0x3a0] sm:$0xff]
      %v671 = vld [vmem:[%s4 + $0x3a8] sm:$0xff]
      %v672 = vld [vmem:[%s4 + $0x3b0] sm:$0xff]
      %v673 = vld [vmem:[%s4 + $0x3b8] sm:$0xff]
      %v674 = vld [vmem:[%s4 + $0x3c0] sm:$0xff]
      %v675 = vld [vmem:[%s4 + $0x3c8] sm:$0xff]
      %v676 = vld [vmem:[%s4 + $0x3d0] sm:$0xff]
      %v677 = vld [vmem:[%s4 + $0x3d8] sm:$0xff]
      %v678 = vld [vmem:[%s4 + $0x3e0] sm:$0xff]
      %v679 = vld [vmem:[%s4 + $0x3e8] sm:$0xff]
      %v680 = vld [vmem:[%s4 + $0x3f0] sm:$0xff]
      %v681 = vld [vmem:[%s4 + $0x3f8] sm:$0xff]
      %v810 = vunpack.c.l.b16 %v554
      %v811 = vunpack.c.h.b16 %v554
      %v812 = vunpack.c.l.b16 %v555
      %v813 = vunpack.c.h.b16 %v555
      %v814 = vunpack.c.l.b16 %v556
      %v815 = vunpack.c.h.b16 %v556
      %v816 = vunpack.c.l.b16 %v557
      %v817 = vunpack.c.h.b16 %v557
      %v818 = vunpack.c.l.b16 %v558
      %v819 = vunpack.c.h.b16 %v558
      %v820 = vunpack.c.l.b16 %v559
      %v821 = vunpack.c.h.b16 %v559
      %v822 = vunpack.c.l.b16 %v560
      %v823 = vunpack.c.h.b16 %v560
      %v824 = vunpack.c.l.b16 %v561
      %v825 = vunpack.c.h.b16 %v561
      %v826 = vunpack.c.l.b16 %v562
      %v827 = vunpack.c.h.b16 %v562
      %v828 = vunpack.c.l.b16 %v563
      %v829 = vunpack.c.h.b16 %v563
      %v830 = vunpack.c.l.b16 %v564
      %v831 = vunpack.c.h.b16 %v564
      %v832 = vunpack.c.l.b16 %v565
      %v833 = vunpack.c.h.b16 %v565
      %v834 = vunpack.c.l.b16 %v566
      %v835 = vunpack.c.h.b16 %v566
      %v836 = vunpack.c.l.b16 %v567
      %v837 = vunpack.c.h.b16 %v567
      %v838 = vunpack.c.l.b16 %v568
      %v839 = vunpack.c.h.b16 %v568
      %v840 = vunpack.c.l.b16 %v569
      %v841 = vunpack.c.h.b16 %v569
      %v842 = vunpack.c.l.b16 %v570
      %v843 = vunpack.c.h.b16 %v570
      %v844 = vunpack.c.l.b16 %v571
      %v845 = vunpack.c.h.b16 %v571
      %v846 = vunpack.c.l.b16 %v572
      %v847 = vunpack.c.h.b16 %v572
      %v848 = vunpack.c.l.b16 %v573
      %v849 = vunpack.c.h.b16 %v573
      %v850 = vunpack.c.l.b16 %v574
      %v851 = vunpack.c.h.b16 %v574
      %v852 = vunpack.c.l.b16 %v575
      %v853 = vunpack.c.h.b16 %v575
      %v854 = vunpack.c.l.b16 %v576
      %v855 = vunpack.c.h.b16 %v576
      %v856 = vunpack.c.l.b16 %v577
      %v857 = vunpack.c.h.b16 %v577
      %v858 = vunpack.c.l.b16 %v578
      %v859 = vunpack.c.h.b16 %v578
      %v860 = vunpack.c.l.b16 %v579
      %v861 = vunpack.c.h.b16 %v579
      %v862 = vunpack.c.l.b16 %v580
      %v863 = vunpack.c.h.b16 %v580
      %v864 = vunpack.c.l.b16 %v581
      %v865 = vunpack.c.h.b16 %v581
      %v866 = vunpack.c.l.b16 %v582
      %v867 = vunpack.c.h.b16 %v582
      %v868 = vunpack.c.l.b16 %v583
      %v869 = vunpack.c.h.b16 %v583
      %v870 = vunpack.c.l.b16 %v584
      %v871 = vunpack.c.h.b16 %v584
      %v872 = vunpack.c.l.b16 %v585
      %v873 = vunpack.c.h.b16 %v585
      %v874 = vunpack.c.l.b16 %v586
      %v875 = vunpack.c.h.b16 %v586
      %v876 = vunpack.c.l.b16 %v587
      %v877 = vunpack.c.h.b16 %v587
      %v878 = vunpack.c.l.b16 %v588
      %v879 = vunpack.c.h.b16 %v588
      %v880 = vunpack.c.l.b16 %v589
      %v881 = vunpack.c.h.b16 %v589
      %v882 = vunpack.c.l.b16 %v590
      %v883 = vunpack.c.h.b16 %v590
      %v884 = vunpack.c.l.b16 %v591
      %v885 = vunpack.c.h.b16 %v591
      %v886 = vunpack.c.l.b16 %v592
      %v887 = vunpack.c.h.b16 %v592
      %v888 = vunpack.c.l.b16 %v593
      %v889 = vunpack.c.h.b16 %v593
      %v890 = vunpack.c.l.b16 %v594
      %v891 = vunpack.c.h.b16 %v594
      %v892 = vunpack.c.l.b16 %v595
      %v893 = vunpack.c.h.b16 %v595
      %v894 = vunpack.c.l.b16 %v596
      %v895 = vunpack.c.h.b16 %v596
      %v896 = vunpack.c.l.b16 %v597
      %v897 = vunpack.c.h.b16 %v597
      %v898 = vunpack.c.l.b16 %v598
      %v899 = vunpack.c.h.b16 %v598
      %v900 = vunpack.c.l.b16 %v599
      %v901 = vunpack.c.h.b16 %v599
      %v902 = vunpack.c.l.b16 %v600
      %v903 = vunpack.c.h.b16 %v600
      %v904 = vunpack.c.l.b16 %v601
      %v905 = vunpack.c.h.b16 %v601
      %v906 = vunpack.c.l.b16 %v602
      %v907 = vunpack.c.h.b16 %v602
      %v908 = vunpack.c.l.b16 %v603
      %v909 = vunpack.c.h.b16 %v603
      %v910 = vunpack.c.l.b16 %v604
      %v911 = vunpack.c.h.b16 %v604
      %v912 = vunpack.c.l.b16 %v605
      %v913 = vunpack.c.h.b16 %v605
      %v914 = vunpack.c.l.b16 %v606
      %v915 = vunpack.c.h.b16 %v606
      %v916 = vunpack.c.l.b16 %v607
      %v917 = vunpack.c.h.b16 %v607
      %v918 = vunpack.c.l.b16 %v608
      %v919 = vunpack.c.h.b16 %v608
      %v920 = vunpack.c.l.b16 %v609
      %v921 = vunpack.c.h.b16 %v609
      %v922 = vunpack.c.l.b16 %v610
      %v923 = vunpack.c.h.b16 %v610
      %v924 = vunpack.c.l.b16 %v611
      %v925 = vunpack.c.h.b16 %v611
      %v926 = vunpack.c.l.b16 %v612
      %v927 = vunpack.c.h.b16 %v612
      %v928 = vunpack.c.l.b16 %v613
      %v929 = vunpack.c.h.b16 %v613
      %v930 = vunpack.c.l.b16 %v614
      %v931 = vunpack.c.h.b16 %v614
      %v932 = vunpack.c.l.b16 %v615
      %v933 = vunpack.c.h.b16 %v615
      %v934 = vunpack.c.l.b16 %v616
      %v935 = vunpack.c.h.b16 %v616
      %v936 = vunpack.c.l.b16 %v617
      %v937 = vunpack.c.h.b16 %v617
      %v938 = vunpack.c.l.b16 %v618
      %v939 = vunpack.c.h.b16 %v618
      %v940 = vunpack.c.l.b16 %v619
      %v941 = vunpack.c.h.b16 %v619
      %v942 = vunpack.c.l.b16 %v620
      %v943 = vunpack.c.h.b16 %v620
      %v944 = vunpack.c.l.b16 %v621
      %v945 = vunpack.c.h.b16 %v621
      %v946 = vunpack.c.l.b16 %v622
      %v947 = vunpack.c.h.b16 %v622
      %v948 = vunpack.c.l.b16 %v623
      %v949 = vunpack.c.h.b16 %v623
      %v950 = vunpack.c.l.b16 %v624
      %v951 = vunpack.c.h.b16 %v624
      %v952 = vunpack.c.l.b16 %v625
      %v953 = vunpack.c.h.b16 %v625
      %v954 = vunpack.c.l.b16 %v626
      %v955 = vunpack.c.h.b16 %v626
      %v956 = vunpack.c.l.b16 %v627
      %v957 = vunpack.c.h.b16 %v627
      %v958 = vunpack.c.l.b16 %v628
      %v959 = vunpack.c.h.b16 %v628
      %v960 = vunpack.c.l.b16 %v629
      %v961 = vunpack.c.h.b16 %v629
      %v962 = vunpack.c.l.b16 %v630
      %v963 = vunpack.c.h.b16 %v630
      %v964 = vunpack.c.l.b16 %v631
      %v965 = vunpack.c.h.b16 %v631
      %v966 = vunpack.c.l.b16 %v632
      %v967 = vunpack.c.h.b16 %v632
      %v968 = vunpack.c.l.b16 %v633
      %v969 = vunpack.c.h.b16 %v633
      %v970 = vunpack.c.l.b16 %v634
      %v971 = vunpack.c.h.b16 %v634
      %v972 = vunpack.c.l.b16 %v635
      %v973 = vunpack.c.h.b16 %v635
      %v974 = vunpack.c.l.b16 %v636
      %v975 = vunpack.c.h.b16 %v636
      %v976 = vunpack.c.l.b16 %v637
      %v977 = vunpack.c.h.b16 %v637
      %v978 = vunpack.c.l.b16 %v638
      %v979 = vunpack.c.h.b16 %v638
      %v980 = vunpack.c.l.b16 %v639
      %v981 = vunpack.c.h.b16 %v639
      %v982 = vunpack.c.l.b16 %v640
      %v983 = vunpack.c.h.b16 %v640
      %v984 = vunpack.c.l.b16 %v641
      %v985 = vunpack.c.h.b16 %v641
      %v986 = vunpack.c.l.b16 %v642
      %v987 = vunpack.c.h.b16 %v642
      %v988 = vunpack.c.l.b16 %v643
      %v989 = vunpack.c.h.b16 %v643
      %v990 = vunpack.c.l.b16 %v644
      %v991 = vunpack.c.h.b16 %v644
      %v992 = vunpack.c.l.b16 %v645
      %v993 = vunpack.c.h.b16 %v645
      %v994 = vunpack.c.l.b16 %v646
      %v995 = vunpack.c.h.b16 %v646
      %v996 = vunpack.c.l.b16 %v647
      %v997 = vunpack.c.h.b16 %v647
      %v998 = vunpack.c.l.b16 %v648
      %v999 = vunpack.c.h.b16 %v648
      %v1000 = vunpack.c.l.b16 %v649
      %v1001 = vunpack.c.h.b16 %v649
      %v1002 = vunpack.c.l.b16 %v650
      %v1003 = vunpack.c.h.b16 %v650
      %v1004 = vunpack.c.l.b16 %v651
      %v1005 = vunpack.c.h.b16 %v651
      %v1006 = vunpack.c.l.b16 %v652
      %v1007 = vunpack.c.h.b16 %v652
      %v1008 = vunpack.c.l.b16 %v653
      %v1009 = vunpack.c.h.b16 %v653
      %v1010 = vunpack.c.l.b16 %v654
      %v1011 = vunpack.c.h.b16 %v654
      %v1012 = vunpack.c.l.b16 %v655
      %v1013 = vunpack.c.h.b16 %v655
      %v1014 = vunpack.c.l.b16 %v656
      %v1015 = vunpack.c.h.b16 %v656
      %v1016 = vunpack.c.l.b16 %v657
      %v1017 = vunpack.c.h.b16 %v657
      %v1018 = vunpack.c.l.b16 %v658
      %v1019 = vunpack.c.h.b16 %v658
      %v1020 = vunpack.c.l.b16 %v659
      %v1021 = vunpack.c.h.b16 %v659
      %v1022 = vunpack.c.l.b16 %v660
      %v1023 = vunpack.c.h.b16 %v660
      %v1024 = vunpack.c.l.b16 %v661
      %v1025 = vunpack.c.h.b16 %v661
      %v1026 = vunpack.c.l.b16 %v662
      %v1027 = vunpack.c.h.b16 %v662
      %v1028 = vunpack.c.l.b16 %v663
      %v1029 = vunpack.c.h.b16 %v663
      %v1030 = vunpack.c.l.b16 %v664
      %v1031 = vunpack.c.h.b16 %v664
      %v1032 = vunpack.c.l.b16 %v665
      %v1033 = vunpack.c.h.b16 %v665
      %v1034 = vunpack.c.l.b16 %v666
      %v1035 = vunpack.c.h.b16 %v666
      %v1036 = vunpack.c.l.b16 %v667
      %v1037 = vunpack.c.h.b16 %v667
      %v1038 = vunpack.c.l.b16 %v668
      %v1039 = vunpack.c.h.b16 %v668
      %v1040 = vunpack.c.l.b16 %v669
      %v1041 = vunpack.c.h.b16 %v669
      %v1042 = vunpack.c.l.b16 %v670
      %v1043 = vunpack.c.h.b16 %v670
      %v1044 = vunpack.c.l.b16 %v671
      %v1045 = vunpack.c.h.b16 %v671
      %v1046 = vunpack.c.l.b16 %v672
      %v1047 = vunpack.c.h.b16 %v672
      %v1048 = vunpack.c.l.b16 %v673
      %v1049 = vunpack.c.h.b16 %v673
      %v1050 = vunpack.c.l.b16 %v674
      %v1051 = vunpack.c.h.b16 %v674
      %v1052 = vunpack.c.l.b16 %v675
      %v1053 = vunpack.c.h.b16 %v675
      %v1054 = vunpack.c.l.b16 %v676
      %v1055 = vunpack.c.h.b16 %v676
      %v1056 = vunpack.c.l.b16 %v677
      %v1057 = vunpack.c.h.b16 %v677
      %v1058 = vunpack.c.l.b16 %v678
      %v1059 = vunpack.c.h.b16 %v678
      %v1060 = vunpack.c.l.b16 %v679
      %v1061 = vunpack.c.h.b16 %v679
      %v1062 = vunpack.c.l.b16 %v680
      %v1063 = vunpack.c.h.b16 %v680
      %v1064 = vunpack.c.l.b16 %v681
      %v1065 = vunpack.c.h.b16 %v681
      %v1066 = vpack.c.b16 %v818, %v810
      %v1067 = vpack.c.b16 %v819, %v811
      %v1068 = vpack.c.b16 %v820, %v812
      %v1069 = vpack.c.b16 %v821, %v813
      %v1070 = vpack.c.b16 %v822, %v814
      %v1071 = vpack.c.b16 %v823, %v815
      %v1072 = vpack.c.b16 %v824, %v816
      %v1073 = vpack.c.b16 %v825, %v817
      %v1074 = vpack.c.b16 %v834, %v826
      %v1075 = vpack.c.b16 %v835, %v827
      %v1076 = vpack.c.b16 %v836, %v828
      %v1077 = vpack.c.b16 %v837, %v829
      %v1078 = vpack.c.b16 %v838, %v830
      %v1079 = vpack.c.b16 %v839, %v831
      %v1080 = vpack.c.b16 %v840, %v832
      %v1081 = vpack.c.b16 %v841, %v833
      %v1082 = vpack.c.b16 %v850, %v842
      %v1083 = vpack.c.b16 %v851, %v843
      %v1084 = vpack.c.b16 %v852, %v844
      %v1085 = vpack.c.b16 %v853, %v845
      %v1086 = vpack.c.b16 %v854, %v846
      %v1087 = vpack.c.b16 %v855, %v847
      %v1088 = vpack.c.b16 %v856, %v848
      %v1089 = vpack.c.b16 %v857, %v849
      %v1090 = vpack.c.b16 %v866, %v858
      %v1091 = vpack.c.b16 %v867, %v859
      %v1092 = vpack.c.b16 %v868, %v860
      %v1093 = vpack.c.b16 %v869, %v861
      %v1094 = vpack.c.b16 %v870, %v862
      %v1095 = vpack.c.b16 %v871, %v863
      %v1096 = vpack.c.b16 %v872, %v864
      %v1097 = vpack.c.b16 %v873, %v865
      %v1098 = vpack.c.b16 %v882, %v874
      %v1099 = vpack.c.b16 %v883, %v875
      %v1100 = vpack.c.b16 %v884, %v876
      %v1101 = vpack.c.b16 %v885, %v877
      %v1102 = vpack.c.b16 %v886, %v878
      %v1103 = vpack.c.b16 %v887, %v879
      %v1104 = vpack.c.b16 %v888, %v880
      %v1105 = vpack.c.b16 %v889, %v881
      %v1106 = vpack.c.b16 %v898, %v890
      %v1107 = vpack.c.b16 %v899, %v891
      %v1108 = vpack.c.b16 %v900, %v892
      %v1109 = vpack.c.b16 %v901, %v893
      %v1110 = vpack.c.b16 %v902, %v894
      %v1111 = vpack.c.b16 %v903, %v895
      %v1112 = vpack.c.b16 %v904, %v896
      %v1113 = vpack.c.b16 %v905, %v897
      %v1114 = vpack.c.b16 %v914, %v906
      %v1115 = vpack.c.b16 %v915, %v907
      %v1116 = vpack.c.b16 %v916, %v908
      %v1117 = vpack.c.b16 %v917, %v909
      %v1118 = vpack.c.b16 %v918, %v910
      %v1119 = vpack.c.b16 %v919, %v911
      %v1120 = vpack.c.b16 %v920, %v912
      %v1121 = vpack.c.b16 %v921, %v913
      %v1122 = vpack.c.b16 %v930, %v922
      %v1123 = vpack.c.b16 %v931, %v923
      %v1124 = vpack.c.b16 %v932, %v924
      %v1125 = vpack.c.b16 %v933, %v925
      %v1126 = vpack.c.b16 %v934, %v926
      %v1127 = vpack.c.b16 %v935, %v927
      %v1128 = vpack.c.b16 %v936, %v928
      %v1129 = vpack.c.b16 %v937, %v929
      %v1130 = vpack.c.b16 %v946, %v938
      %v1131 = vpack.c.b16 %v947, %v939
      %v1132 = vpack.c.b16 %v948, %v940
      %v1133 = vpack.c.b16 %v949, %v941
      %v1134 = vpack.c.b16 %v950, %v942
      %v1135 = vpack.c.b16 %v951, %v943
      %v1136 = vpack.c.b16 %v952, %v944
      %v1137 = vpack.c.b16 %v953, %v945
      %v1138 = vpack.c.b16 %v962, %v954
      %v1139 = vpack.c.b16 %v963, %v955
      %v1140 = vpack.c.b16 %v964, %v956
      %v1141 = vpack.c.b16 %v965, %v957
      %v1142 = vpack.c.b16 %v966, %v958
      %v1143 = vpack.c.b16 %v967, %v959
      %v1144 = vpack.c.b16 %v968, %v960
      %v1145 = vpack.c.b16 %v969, %v961
      %v1146 = vpack.c.b16 %v978, %v970
      %v1147 = vpack.c.b16 %v979, %v971
      %v1148 = vpack.c.b16 %v980, %v972
      %v1149 = vpack.c.b16 %v981, %v973
      %v1150 = vpack.c.b16 %v982, %v974
      %v1151 = vpack.c.b16 %v983, %v975
      %v1152 = vpack.c.b16 %v984, %v976
      %v1153 = vpack.c.b16 %v985, %v977
      %v1154 = vpack.c.b16 %v994, %v986
      %v1155 = vpack.c.b16 %v995, %v987
      %v1156 = vpack.c.b16 %v996, %v988
      %v1157 = vpack.c.b16 %v997, %v989
      %v1158 = vpack.c.b16 %v998, %v990
      %v1159 = vpack.c.b16 %v999, %v991
      %v1160 = vpack.c.b16 %v1000, %v992
      %v1161 = vpack.c.b16 %v1001, %v993
      %v1162 = vpack.c.b16 %v1010, %v1002
      %v1163 = vpack.c.b16 %v1011, %v1003
      %v1164 = vpack.c.b16 %v1012, %v1004
      %v1165 = vpack.c.b16 %v1013, %v1005
      %v1166 = vpack.c.b16 %v1014, %v1006
      %v1167 = vpack.c.b16 %v1015, %v1007
      %v1168 = vpack.c.b16 %v1016, %v1008
      %v1169 = vpack.c.b16 %v1017, %v1009
      %v1170 = vpack.c.b16 %v1026, %v1018
      %v1171 = vpack.c.b16 %v1027, %v1019
      %v1172 = vpack.c.b16 %v1028, %v1020
      %v1173 = vpack.c.b16 %v1029, %v1021
      %v1174 = vpack.c.b16 %v1030, %v1022
      %v1175 = vpack.c.b16 %v1031, %v1023
      %v1176 = vpack.c.b16 %v1032, %v1024
      %v1177 = vpack.c.b16 %v1033, %v1025
      %v1178 = vpack.c.b16 %v1042, %v1034
      %v1179 = vpack.c.b16 %v1043, %v1035
      %v1180 = vpack.c.b16 %v1044, %v1036
      %v1181 = vpack.c.b16 %v1045, %v1037
      %v1182 = vpack.c.b16 %v1046, %v1038
      %v1183 = vpack.c.b16 %v1047, %v1039
      %v1184 = vpack.c.b16 %v1048, %v1040
      %v1185 = vpack.c.b16 %v1049, %v1041
      %v1186 = vpack.c.b16 %v1058, %v1050
      %v1187 = vpack.c.b16 %v1059, %v1051
      %v1188 = vpack.c.b16 %v1060, %v1052
      %v1189 = vpack.c.b16 %v1061, %v1053
      %v1190 = vpack.c.b16 %v1062, %v1054
      %v1191 = vpack.c.b16 %v1063, %v1055
      %v1192 = vpack.c.b16 %v1064, %v1056
      %v1193 = vpack.c.b16 %v1065, %v1057
      %1322 = vmatprep.subr.bf16.mxu0 %v1123
      %1323 = vmatpush1.bf16.msra.mxu0 %v1122
      %1324 = vmatprep.subr.bf16.mxu0 %v1115
      %1325 = vmatpush1.bf16.msra.mxu0 %v1114
      %1326 = vmatprep.subr.bf16.mxu0 %v1107
      %1327 = vmatpush1.bf16.msra.mxu0 %v1106
      %1328 = vmatprep.subr.bf16.mxu0 %v1099
      %1329 = vmatpush1.bf16.msra.mxu0 %v1098
      %1330 = vmatprep.subr.bf16.mxu0 %v1091
      %1331 = vmatpush1.bf16.msra.mxu0 %v1090
      %1332 = vmatprep.subr.bf16.mxu0 %v1083
      %1333 = vmatpush1.bf16.msra.mxu0 %v1082
      %1334 = vmatprep.subr.bf16.mxu0 %v1075
      %1335 = vmatpush1.bf16.msra.mxu0 %v1074
      %1336 = vmatprep.subr.bf16.mxu0 %v1067
      %1337 = vmatpush1.bf16.msra.mxu0 %v1066
      %1338 = vmatprep.subr.bf16.mxu0 %v1187
      %1339 = vmatpush2.bf16.msra.mxu0 %v1186
      %1340 = vmatprep.subr.bf16.mxu0 %v1179
      %1341 = vmatpush2.bf16.msra.mxu0 %v1178
      %1342 = vmatprep.subr.bf16.mxu0 %v1171
      %1343 = vmatpush2.bf16.msra.mxu0 %v1170
      %1344 = vmatprep.subr.bf16.mxu0 %v1163
      %1345 = vmatpush2.bf16.msra.mxu0 %v1162
      %1346 = vmatprep.subr.bf16.mxu0 %v1155
      %1347 = vmatpush2.bf16.msra.mxu0 %v1154
      %1348 = vmatprep.subr.bf16.mxu0 %v1147
      %1349 = vmatpush2.bf16.msra.mxu0 %v1146
      %1350 = vmatprep.subr.bf16.mxu0 %v1139
      %1351 = vmatpush2.bf16.msra.mxu0 %v1138
      %1352 = vmatprep.subr.bf16.mxu0 %v1131
      %1353 = vmatpush2.bf16.msra.mxu0 %v1130
      %1354 = vmatprep.mubr.bf16.mxu0 %v551
      %1355 = vmatmul.mubr.bf16.gmra.mxu0 %v550
      %v1356 = vpop.f32.mrf.mxu0
      %v1357 = vadd.f32 0.0, %v1356
      %v1358 = vpop.f32.mrf.mxu0
      %v1359 = vadd.f32 0.0, %v1358
      %v1360 = vpop.f32.mrf.mxu0
      %v1361 = vadd.f32 0.0, %v1360
      %v1362 = vpop.f32.mrf.mxu0
      %v1363 = vadd.f32 0.0, %v1362
      %1364 = vmatprep.mubr.bf16.mxu0 %v553
      %1365 = vmatmul.mubr.bf16.gmra.mxu0 %v552
      %v1366 = vpop.f32.mrf.mxu0
      %v1367 = vadd.f32 0.0, %v1366
      %v1368 = vpop.f32.mrf.mxu0
      %v1369 = vadd.f32 0.0, %v1368
      %v1370 = vpop.f32.mrf.mxu0
      %v1371 = vadd.f32 0.0, %v1370
      %v1372 = vpop.f32.mrf.mxu0
      %v1373 = vadd.f32 0.0, %v1372
      %1374 = vdwg.mxu0
      %1375 = vmatprep.subr.bf16.mxu0 %v1125
      %1376 = vmatpush1.bf16.msra.mxu0 %v1124
      %1377 = vmatprep.subr.bf16.mxu0 %v1117
      %1378 = vmatpush1.bf16.msra.mxu0 %v1116
      %1379 = vmatprep.subr.bf16.mxu0 %v1109
      %1380 = vmatpush1.bf16.msra.mxu0 %v1108
      %1381 = vmatprep.subr.bf16.mxu0 %v1101
      %1382 = vmatpush1.bf16.msra.mxu0 %v1100
      %1383 = vmatprep.subr.bf16.mxu0 %v1093
      %1384 = vmatpush1.bf16.msra.mxu0 %v1092
      %1385 = vmatprep.subr.bf16.mxu0 %v1085
      %1386 = vmatpush1.bf16.msra.mxu0 %v1084
      %1387 = vmatprep.subr.bf16.mxu0 %v1077
      %1388 = vmatpush1.bf16.msra.mxu0 %v1076
      %1389 = vmatprep.subr.bf16.mxu0 %v1069
      %1390 = vmatpush1.bf16.msra.mxu0 %v1068
      %1391 = vmatprep.subr.bf16.mxu0 %v1189
      %1392 = vmatpush2.bf16.msra.mxu0 %v1188
      %1393 = vmatprep.subr.bf16.mxu0 %v1181
      %1394 = vmatpush2.bf16.msra.mxu0 %v1180
      %1395 = vmatprep.subr.bf16.mxu0 %v1173
      %1396 = vmatpush2.bf16.msra.mxu0 %v1172
      %1397 = vmatprep.subr.bf16.mxu0 %v1165
      %1398 = vmatpush2.bf16.msra.mxu0 %v1164
      %1399 = vmatprep.subr.bf16.mxu0 %v1157
      %1400 = vmatpush2.bf16.msra.mxu0 %v1156
      %1401 = vmatprep.subr.bf16.mxu0 %v1149
      %1402 = vmatpush2.bf16.msra.mxu0 %v1148
      %1403 = vmatprep.subr.bf16.mxu0 %v1141
      %1404 = vmatpush2.bf16.msra.mxu0 %v1140
      %1405 = vmatprep.subr.bf16.mxu0 %v1133
      %1406 = vmatpush2.bf16.msra.mxu0 %v1132
      %1407 = vmatprep.mubr.bf16.mxu0 %v551
      %1408 = vmatmul.mubr.bf16.gmra.mxu0 %v550
      %v1409 = vpop.f32.mrf.mxu0
      %v1410 = vadd.f32 0.0, %v1409
      %v1411 = vpop.f32.mrf.mxu0
      %v1412 = vadd.f32 0.0, %v1411
      %v1413 = vpop.f32.mrf.mxu0
      %v1414 = vadd.f32 0.0, %v1413
      %v1415 = vpop.f32.mrf.mxu0
      %v1416 = vadd.f32 0.0, %v1415
      %1417 = vmatprep.mubr.bf16.mxu0 %v553
      %1418 = vmatmul.mubr.bf16.gmra.mxu0 %v552
      %v1419 = vpop.f32.mrf.mxu0
      %v1420 = vadd.f32 0.0, %v1419
      %v1421 = vpop.f32.mrf.mxu0
      %v1422 = vadd.f32 0.0, %v1421
      %v1423 = vpop.f32.mrf.mxu0
      %v1424 = vadd.f32 0.0, %v1423
      %v1425 = vpop.f32.mrf.mxu0
      %v1426 = vadd.f32 0.0, %v1425
      %1427 = vdwg.mxu0
      %1428 = vmatprep.subr.bf16.mxu0 %v1127
      %1429 = vmatpush1.bf16.msra.mxu0 %v1126
      %1430 = vmatprep.subr.bf16.mxu0 %v1119
      %1431 = vmatpush1.bf16.msra.mxu0 %v1118
      %1432 = vmatprep.subr.bf16.mxu0 %v1111
      %1433 = vmatpush1.bf16.msra.mxu0 %v1110
      %1434 = vmatprep.subr.bf16.mxu0 %v1103
      %1435 = vmatpush1.bf16.msra.mxu0 %v1102
      %1436 = vmatprep.subr.bf16.mxu0 %v1095
      %1437 = vmatpush1.bf16.msra.mxu0 %v1094
      %1438 = vmatprep.subr.bf16.mxu0 %v1087
      %1439 = vmatpush1.bf16.msra.mxu0 %v1086
      %1440 = vmatprep.subr.bf16.mxu0 %v1079
      %1441 = vmatpush1.bf16.msra.mxu0 %v1078
      %1442 = vmatprep.subr.bf16.mxu0 %v1071
      %1443 = vmatpush1.bf16.msra.mxu0 %v1070
      %1444 = vmatprep.subr.bf16.mxu0 %v1191
      %1445 = vmatpush2.bf16.msra.mxu0 %v1190
      %1446 = vmatprep.subr.bf16.mxu0 %v1183
      %1447 = vmatpush2.bf16.msra.mxu0 %v1182
      %1448 = vmatprep.subr.bf16.mxu0 %v1175
      %1449 = vmatpush2.bf16.msra.mxu0 %v1174
      %1450 = vmatprep.subr.bf16.mxu0 %v1167
      %1451 = vmatpush2.bf16.msra.mxu0 %v1166
      %1452 = vmatprep.subr.bf16.mxu0 %v1159
      %1453 = vmatpush2.bf16.msra.mxu0 %v1158
      %1454 = vmatprep.subr.bf16.mxu0 %v1151
      %1455 = vmatpush2.bf16.msra.mxu0 %v1150
      %1456 = vmatprep.subr.bf16.mxu0 %v1143
      %1457 = vmatpush2.bf16.msra.mxu0 %v1142
      %1458 = vmatprep.subr.bf16.mxu0 %v1135
      %1459 = vmatpush2.bf16.msra.mxu0 %v1134
      %1460 = vmatprep.mubr.bf16.mxu0 %v551
      %1461 = vmatmul.mubr.bf16.gmra.mxu0 %v550
      %v1462 = vpop.f32.mrf.mxu0
      %v1463 = vadd.f32 0.0, %v1462
      %v1464 = vpop.f32.mrf.mxu0
      %v1465 = vadd.f32 0.0, %v1464
      %v1466 = vpop.f32.mrf.mxu0
      %v1467 = vadd.f32 0.0, %v1466
      %v1468 = vpop.f32.mrf.mxu0
      %v1469 = vadd.f32 0.0, %v1468
      %1470 = vmatprep.mubr.bf16.mxu0 %v553
      %1471 = vmatmul.mubr.bf16.gmra.mxu0 %v552
      %v1472 = vpop.f32.mrf.mxu0
      %v1473 = vadd.f32 0.0, %v1472
      %v1474 = vpop.f32.mrf.mxu0
      %v1475 = vadd.f32 0.0, %v1474
      %v1476 = vpop.f32.mrf.mxu0
      %v1477 = vadd.f32 0.0, %v1476
      %v1478 = vpop.f32.mrf.mxu0
      %v1479 = vadd.f32 0.0, %v1478
      %1480 = vdwg.mxu0
      %1481 = vmatprep.subr.bf16.mxu0 %v1129
      %1482 = vmatpush1.bf16.msra.mxu0 %v1128
      %1483 = vmatprep.subr.bf16.mxu0 %v1121
      %1484 = vmatpush1.bf16.msra.mxu0 %v1120
      %1485 = vmatprep.subr.bf16.mxu0 %v1113
      %1486 = vmatpush1.bf16.msra.mxu0 %v1112
      %1487 = vmatprep.subr.bf16.mxu0 %v1105
      %1488 = vmatpush1.bf16.msra.mxu0 %v1104
      %1489 = vmatprep.subr.bf16.mxu0 %v1097
      %1490 = vmatpush1.bf16.msra.mxu0 %v1096
      %1491 = vmatprep.subr.bf16.mxu0 %v1089
      %1492 = vmatpush1.bf16.msra.mxu0 %v1088
      %1493 = vmatprep.subr.bf16.mxu0 %v1081
      %1494 = vmatpush1.bf16.msra.mxu0 %v1080
      %1495 = vmatprep.subr.bf16.mxu0 %v1073
      %1496 = vmatpush1.bf16.msra.mxu0 %v1072
      %1497 = vmatprep.subr.bf16.mxu0 %v1193
      %1498 = vmatpush2.bf16.msra.mxu0 %v1192
      %1499 = vmatprep.subr.bf16.mxu0 %v1185
      %1500 = vmatpush2.bf16.msra.mxu0 %v1184
      %1501 = vmatprep.subr.bf16.mxu0 %v1177
      %1502 = vmatpush2.bf16.msra.mxu0 %v1176
      %1503 = vmatprep.subr.bf16.mxu0 %v1169
      %1504 = vmatpush2.bf16.msra.mxu0 %v1168
      %1505 = vmatprep.subr.bf16.mxu0 %v1161
      %1506 = vmatpush2.bf16.msra.mxu0 %v1160
      %1507 = vmatprep.subr.bf16.mxu0 %v1153
      %1508 = vmatpush2.bf16.msra.mxu0 %v1152
      %1509 = vmatprep.subr.bf16.mxu0 %v1145
      %1510 = vmatpush2.bf16.msra.mxu0 %v1144
      %1511 = vmatprep.subr.bf16.mxu0 %v1137
      %1512 = vmatpush2.bf16.msra.mxu0 %v1136
      %1513 = vmatprep.mubr.bf16.mxu0 %v551
      %1514 = vmatmul.mubr.bf16.gmra.mxu0 %v550
      %v1515 = vpop.f32.mrf.mxu0
      %v1516 = vadd.f32 0.0, %v1515
      %v1517 = vpop.f32.mrf.mxu0
      %v1518 = vadd.f32 0.0, %v1517
      %v1519 = vpop.f32.mrf.mxu0
      %v1520 = vadd.f32 0.0, %v1519
      %v1521 = vpop.f32.mrf.mxu0
      %v1522 = vadd.f32 0.0, %v1521
      %1523 = vmatprep.mubr.bf16.mxu0 %v553
      %1524 = vmatmul.mubr.bf16.gmra.mxu0 %v552
      %v1525 = vpop.f32.mrf.mxu0
      %v1526 = vadd.f32 0.0, %v1525
      %v1527 = vpop.f32.mrf.mxu0
      %v1528 = vadd.f32 0.0, %v1527
      %v1529 = vpop.f32.mrf.mxu0
      %v1530 = vadd.f32 0.0, %v1529
      %v1531 = vpop.f32.mrf.mxu0
      %v1532 = vadd.f32 0.0, %v1531
      %1533 = vdwg.mxu0
      %v1534 = vld [vmem:[%s5] sm:$0xff]
      %v1535 = vld [vmem:[%s5 + $0x8] sm:$0xff]
      %v1536 = vld [vmem:[%s5 + $0x10] sm:$0xff]
      %v1537 = vld [vmem:[%s5 + $0x18] sm:$0xff]
      %1539 = vset.pattern.permute.xlu0 0
      %1540 = vperm.xlu0 %1539, %v1534
      %v1541 = vpop.permute.xlu0 %1540
      %1544 = vset.pattern.permute.xlu0 0
      %1545 = vperm.xlu0 %1544, %v1535
      %v1546 = vpop.permute.xlu0 %1545
      %1549 = vset.pattern.permute.xlu0 0
      %1550 = vperm.xlu0 %1549, %v1536
      %v1551 = vpop.permute.xlu0 %1550
      %1554 = vset.pattern.permute.xlu0 0
      %1555 = vperm.xlu0 %1554, %v1537
      %v1556 = vpop.permute.xlu0 %1555
      %v1558 = vmul.f32 %v1357, %v1541
      %v1559 = vmul.f32 %v1359, %v1541
      %v1560 = vmul.f32 %v1410, %v1541
      %v1561 = vmul.f32 %v1412, %v1541
      %v1562 = vmul.f32 %v1463, %v1541
      %v1563 = vmul.f32 %v1465, %v1541
      %v1564 = vmul.f32 %v1516, %v1541
      %v1565 = vmul.f32 %v1518, %v1541
      %v1566 = vmul.f32 %v1361, %v1546
      %v1567 = vmul.f32 %v1363, %v1546
      %v1568 = vmul.f32 %v1414, %v1546
      %v1569 = vmul.f32 %v1416, %v1546
      %v1570 = vmul.f32 %v1467, %v1546
      %v1571 = vmul.f32 %v1469, %v1546
      %v1572 = vmul.f32 %v1520, %v1546
      %v1573 = vmul.f32 %v1522, %v1546
      %v1574 = vmul.f32 %v1367, %v1551
      %v1575 = vmul.f32 %v1369, %v1551
      %v1576 = vmul.f32 %v1420, %v1551
      %v1577 = vmul.f32 %v1422, %v1551
      %v1578 = vmul.f32 %v1473, %v1551
      %v1579 = vmul.f32 %v1475, %v1551
      %v1580 = vmul.f32 %v1526, %v1551
      %v1581 = vmul.f32 %v1528, %v1551
      %v1582 = vmul.f32 %v1371, %v1556
      %v1583 = vmul.f32 %v1373, %v1556
      %v1584 = vmul.f32 %v1424, %v1556
      %v1585 = vmul.f32 %v1426, %v1556
      %v1586 = vmul.f32 %v1477, %v1556
      %v1587 = vmul.f32 %v1479, %v1556
      %v1588 = vmul.f32 %v1530, %v1556
      %v1589 = vmul.f32 %v1532, %v1556
      %v1590 = vld [vmem:[%s6] sm:$0xff]
      %v1591 = vld [vmem:[%s6 + $0x8] sm:$0xff]
      %v1592 = vld [vmem:[%s6 + $0x10] sm:$0xff]
      %v1593 = vld [vmem:[%s6 + $0x18] sm:$0xff]
      %1595 = vset.pattern.permute.xlu0 0
      %1596 = vperm.xlu0 %1595, %v1590
      %v1597 = vpop.permute.xlu0 %1596
      %1600 = vset.pattern.permute.xlu0 0
      %1601 = vperm.xlu0 %1600, %v1591
      %v1602 = vpop.permute.xlu0 %1601
      %1605 = vset.pattern.permute.xlu0 0
      %1606 = vperm.xlu0 %1605, %v1592
      %v1607 = vpop.permute.xlu0 %1606
      %1610 = vset.pattern.permute.xlu0 0
      %1611 = vperm.xlu0 %1610, %v1593
      %v1612 = vpop.permute.xlu0 %1611
      %v1614 = vadd.f32 %v1558, %v1597
      %v1615 = vadd.f32 %v1559, %v1597
      %v1616 = vadd.f32 %v1560, %v1597
      %v1617 = vadd.f32 %v1561, %v1597
      %v1618 = vadd.f32 %v1562, %v1597
      %v1619 = vadd.f32 %v1563, %v1597
      %v1620 = vadd.f32 %v1564, %v1597
      %v1621 = vadd.f32 %v1565, %v1597
      %v1622 = vadd.f32 %v1566, %v1602
      %v1623 = vadd.f32 %v1567, %v1602
      %v1624 = vadd.f32 %v1568, %v1602
      %v1625 = vadd.f32 %v1569, %v1602
      %v1626 = vadd.f32 %v1570, %v1602
      %v1627 = vadd.f32 %v1571, %v1602
      %v1628 = vadd.f32 %v1572, %v1602
      %v1629 = vadd.f32 %v1573, %v1602
      %v1630 = vadd.f32 %v1574, %v1607
      %v1631 = vadd.f32 %v1575, %v1607
      %v1632 = vadd.f32 %v1576, %v1607
      %v1633 = vadd.f32 %v1577, %v1607
      %v1634 = vadd.f32 %v1578, %v1607
      %v1635 = vadd.f32 %v1579, %v1607
      %v1636 = vadd.f32 %v1580, %v1607
      %v1637 = vadd.f32 %v1581, %v1607
      %v1638 = vadd.f32 %v1582, %v1612
      %v1639 = vadd.f32 %v1583, %v1612
      %v1640 = vadd.f32 %v1584, %v1612
      %v1641 = vadd.f32 %v1585, %v1612
      %v1642 = vadd.f32 %v1586, %v1612
      %v1643 = vadd.f32 %v1587, %v1612
      %v1644 = vadd.f32 %v1588, %v1612
      %v1645 = vadd.f32 %v1589, %v1612
      %v1646 = vmax.f32 %v1614, 0.0
      %v1647 = vmax.f32 %v1615, 0.0
      %v1648 = vmax.f32 %v1616, 0.0
      %v1649 = vmax.f32 %v1617, 0.0
      %v1650 = vmax.f32 %v1618, 0.0
      %v1651 = vmax.f32 %v1619, 0.0
      %v1652 = vmax.f32 %v1620, 0.0
      %v1653 = vmax.f32 %v1621, 0.0
      %v1654 = vmax.f32 %v1622, 0.0
      %v1655 = vmax.f32 %v1623, 0.0
      %v1656 = vmax.f32 %v1624, 0.0
      %v1657 = vmax.f32 %v1625, 0.0
      %v1658 = vmax.f32 %v1626, 0.0
      %v1659 = vmax.f32 %v1627, 0.0
      %v1660 = vmax.f32 %v1628, 0.0
      %v1661 = vmax.f32 %v1629, 0.0
      %v1662 = vmax.f32 %v1630, 0.0
      %v1663 = vmax.f32 %v1631, 0.0
      %v1664 = vmax.f32 %v1632, 0.0
      %v1665 = vmax.f32 %v1633, 0.0
      %v1666 = vmax.f32 %v1634, 0.0
      %v1667 = vmax.f32 %v1635, 0.0
      %v1668 = vmax.f32 %v1636, 0.0
      %v1669 = vmax.f32 %v1637, 0.0
      %v1670 = vmax.f32 %v1638, 0.0
      %v1671 = vmax.f32 %v1639, 0.0
      %v1672 = vmax.f32 %v1640, 0.0
      %v1673 = vmax.f32 %v1641, 0.0
      %v1674 = vmax.f32 %v1642, 0.0
      %v1675 = vmax.f32 %v1643, 0.0
      %v1676 = vmax.f32 %v1644, 0.0
      %v1677 = vmax.f32 %v1645, 0.0
      %v1678 = vld [vmem:[%s7] sm:$0xf]
      %v1679 = vld [vmem:[%s7 + $0x4] sm:$0xf]
      %v1680 = vld [vmem:[%s7 + $0x8] sm:$0xf]
      %v1681 = vld [vmem:[%s7 + $0xc] sm:$0xf]
      %v1682 = vld [vmem:[%s7 + $0x10] sm:$0xf]
      %v1683 = vld [vmem:[%s7 + $0x14] sm:$0xf]
      %v1684 = vld [vmem:[%s7 + $0x18] sm:$0xf]
      %v1685 = vld [vmem:[%s7 + $0x1c] sm:$0xf]
      %v1686 = vpack.c.bf16 %v1654, %v1646
      %v1687 = vpack.c.bf16 %v1655, %v1647
      %v1688 = vpack.c.bf16 %v1656, %v1648
      %v1689 = vpack.c.bf16 %v1657, %v1649
      %v1690 = vpack.c.bf16 %v1658, %v1650
      %v1691 = vpack.c.bf16 %v1659, %v1651
      %v1692 = vpack.c.bf16 %v1660, %v1652
      %v1693 = vpack.c.bf16 %v1661, %v1653
      %v1694 = vpack.c.bf16 %v1670, %v1662
      %v1695 = vpack.c.bf16 %v1671, %v1663
      %v1696 = vpack.c.bf16 %v1672, %v1664
      %v1697 = vpack.c.bf16 %v1673, %v1665
      %v1698 = vpack.c.bf16 %v1674, %v1666
      %v1699 = vpack.c.bf16 %v1675, %v1667
      %v1700 = vpack.c.bf16 %v1676, %v1668
      %v1701 = vpack.c.bf16 %v1677, %v1669
      %v1710 = vunpack.c.l.b16 %v1678
      %v1711 = vunpack.c.l.b16 %v1679
      %v1712 = vunpack.c.l.b16 %v1680
      %v1713 = vunpack.c.l.b16 %v1681
      %v1714 = vunpack.c.l.b16 %v1682
      %v1715 = vunpack.c.l.b16 %v1683
      %v1716 = vunpack.c.l.b16 %v1684
      %v1717 = vunpack.c.l.b16 %v1685
      %v1718 = vpack.c.b16 %v1711, %v1710
      %v1719 = vpack.c.b16 %v1713, %v1712
      %v1720 = vpack.c.b16 %v1715, %v1714
      %v1721 = vpack.c.b16 %v1717, %v1716
      %vm1722 = vcmask 261120
      %v1724 = vsel %vm1722, %v1718, 0
      %v1727 = vsel %vm1722, %v1719, 0
      %v1730 = vsel %vm1722, %v1720, 0
      %v1733 = vsel %vm1722, %v1721, 0
      %1735 = vmatprep.subr.bf16.mxu0 0
      %1736 = vmatpush1.bf16.msra.mxu0 0
      %1737 = vmatprep.subr.bf16.mxu0 0
      %1738 = vmatpush1.bf16.msra.mxu0 0
      %1739 = vmatprep.subr.bf16.mxu0 0
      %1740 = vmatpush1.bf16.msra.mxu0 0
      %1741 = vmatprep.subr.bf16.mxu0 0
      %1742 = vmatpush1.bf16.msra.mxu0 0
      %1743 = vmatprep.subr.bf16.mxu0 0
      %1744 = vmatpush1.bf16.msra.mxu0 0
      %1745 = vmatprep.subr.bf16.mxu0 0
      %1746 = vmatpush1.bf16.msra.mxu0 0
      %1747 = vmatprep.subr.bf16.mxu0 %v1695
      %1748 = vmatpush1.bf16.msra.mxu0 %v1694
      %1749 = vmatprep.subr.bf16.mxu0 %v1687
      %1750 = vmatpush1.bf16.msra.mxu0 %v1686
      %1751 = vmatprep.subr.bf16.mxu0 0
      %1752 = vmatpush2.bf16.msra.mxu0 0
      %1753 = vmatprep.subr.bf16.mxu0 0
      %1754 = vmatpush2.bf16.msra.mxu0 0
      %1755 = vmatprep.subr.bf16.mxu0 0
      %1756 = vmatpush2.bf16.msra.mxu0 0
      %1757 = vmatprep.subr.bf16.mxu0 0
      %1758 = vmatpush2.bf16.msra.mxu0 0
      %1759 = vmatprep.subr.bf16.mxu0 0
      %1760 = vmatpush2.bf16.msra.mxu0 0
      %1761 = vmatprep.subr.bf16.mxu0 0
      %1762 = vmatpush2.bf16.msra.mxu0 0
      %1763 = vmatprep.subr.bf16.mxu0 0
      %1764 = vmatpush2.bf16.msra.mxu0 0
      %1765 = vmatprep.subr.bf16.mxu0 0
      %1766 = vmatpush2.bf16.msra.mxu0 0
      %1767 = vmatprep.mubr.bf16.mxu0 0
      %1768 = vmatmul.mubr.bf16.gmra.mxu0 %v1724
      %v1769 = vpop.f32.mrf.mxu0
      %v1770 = vadd.f32 0.0, %v1769
      %v1771 = vpop.f32.mrf.mxu0
      %v1772 = vadd.f32 0.0, %v1771
      %v1773 = vpop.f32.mrf.mxu0
      %v1774 = vadd.f32 0.0, %v1773
      %v1775 = vpop.f32.mrf.mxu0
      %v1776 = vadd.f32 0.0, %v1775
      %1777 = vmatprep.mubr.bf16.mxu0 0
      %1778 = vmatmul.mubr.bf16.gmra.mxu0 %v1727
      %v1779 = vpop.f32.mrf.mxu0
      %v1780 = vadd.f32 0.0, %v1779
      %v1781 = vpop.f32.mrf.mxu0
      %v1782 = vadd.f32 0.0, %v1781
      %v1783 = vpop.f32.mrf.mxu0
      %v1784 = vadd.f32 0.0, %v1783
      %v1785 = vpop.f32.mrf.mxu0
      %v1786 = vadd.f32 0.0, %v1785
      %1787 = vmatprep.mubr.bf16.mxu0 0
      %1788 = vmatmul.mubr.bf16.gmra.mxu0 %v1730
      %v1789 = vpop.f32.mrf.mxu0
      %v1790 = vadd.f32 0.0, %v1789
      %v1791 = vpop.f32.mrf.mxu0
      %v1792 = vadd.f32 0.0, %v1791
      %v1793 = vpop.f32.mrf.mxu0
      %v1794 = vadd.f32 0.0, %v1793
      %v1795 = vpop.f32.mrf.mxu0
      %v1796 = vadd.f32 0.0, %v1795
      %1797 = vmatprep.mubr.bf16.mxu0 0
      %1798 = vmatmul.mubr.bf16.gmra.mxu0 %v1733
      %v1799 = vpop.f32.mrf.mxu0
      %v1800 = vadd.f32 0.0, %v1799
      %v1801 = vpop.f32.mrf.mxu0
      %v1802 = vadd.f32 0.0, %v1801
      %v1803 = vpop.f32.mrf.mxu0
      %v1804 = vadd.f32 0.0, %v1803
      %v1805 = vpop.f32.mrf.mxu0
      %v1806 = vadd.f32 0.0, %v1805
      %1807 = vdwg.mxu0
      %1808 = vmatprep.subr.bf16.mxu0 0
      %1809 = vmatpush1.bf16.msra.mxu0 0
      %1810 = vmatprep.subr.bf16.mxu0 0
      %1811 = vmatpush1.bf16.msra.mxu0 0
      %1812 = vmatprep.subr.bf16.mxu0 0
      %1813 = vmatpush1.bf16.msra.mxu0 0
      %1814 = vmatprep.subr.bf16.mxu0 0
      %1815 = vmatpush1.bf16.msra.mxu0 0
      %1816 = vmatprep.subr.bf16.mxu0 0
      %1817 = vmatpush1.bf16.msra.mxu0 0
      %1818 = vmatprep.subr.bf16.mxu0 0
      %1819 = vmatpush1.bf16.msra.mxu0 0
      %1820 = vmatprep.subr.bf16.mxu0 %v1697
      %1821 = vmatpush1.bf16.msra.mxu0 %v1696
      %1822 = vmatprep.subr.bf16.mxu0 %v1689
      %1823 = vmatpush1.bf16.msra.mxu0 %v1688
      %1824 = vmatprep.subr.bf16.mxu0 0
      %1825 = vmatpush2.bf16.msra.mxu0 0
      %1826 = vmatprep.subr.bf16.mxu0 0
      %1827 = vmatpush2.bf16.msra.mxu0 0
      %1828 = vmatprep.subr.bf16.mxu0 0
      %1829 = vmatpush2.bf16.msra.mxu0 0
      %1830 = vmatprep.subr.bf16.mxu0 0
      %1831 = vmatpush2.bf16.msra.mxu0 0
      %1832 = vmatprep.subr.bf16.mxu0 0
      %1833 = vmatpush2.bf16.msra.mxu0 0
      %1834 = vmatprep.subr.bf16.mxu0 0
      %1835 = vmatpush2.bf16.msra.mxu0 0
      %1836 = vmatprep.subr.bf16.mxu0 0
      %1837 = vmatpush2.bf16.msra.mxu0 0
      %1838 = vmatprep.subr.bf16.mxu0 0
      %1839 = vmatpush2.bf16.msra.mxu0 0
      %1840 = vmatprep.mubr.bf16.mxu0 0
      %1841 = vmatmul.mubr.bf16.gmra.mxu0 %v1724
      %v1842 = vpop.f32.mrf.mxu0
      %v1843 = vadd.f32 0.0, %v1842
      %v1844 = vpop.f32.mrf.mxu0
      %v1845 = vadd.f32 0.0, %v1844
      %v1846 = vpop.f32.mrf.mxu0
      %v1847 = vadd.f32 0.0, %v1846
      %v1848 = vpop.f32.mrf.mxu0
      %v1849 = vadd.f32 0.0, %v1848
      %1850 = vmatprep.mubr.bf16.mxu0 0
      %1851 = vmatmul.mubr.bf16.gmra.mxu0 %v1727
      %v1852 = vpop.f32.mrf.mxu0
      %v1853 = vadd.f32 0.0, %v1852
      %v1854 = vpop.f32.mrf.mxu0
      %v1855 = vadd.f32 0.0, %v1854
      %v1856 = vpop.f32.mrf.mxu0
      %v1857 = vadd.f32 0.0, %v1856
      %v1858 = vpop.f32.mrf.mxu0
      %v1859 = vadd.f32 0.0, %v1858
      %1860 = vmatprep.mubr.bf16.mxu0 0
      %1861 = vmatmul.mubr.bf16.gmra.mxu0 %v1730
      %v1862 = vpop.f32.mrf.mxu0
      %v1863 = vadd.f32 0.0, %v1862
      %v1864 = vpop.f32.mrf.mxu0
      %v1865 = vadd.f32 0.0, %v1864
      %v1866 = vpop.f32.mrf.mxu0
      %v1867 = vadd.f32 0.0, %v1866
      %v1868 = vpop.f32.mrf.mxu0
      %v1869 = vadd.f32 0.0, %v1868
      %1870 = vmatprep.mubr.bf16.mxu0 0
      %1871 = vmatmul.mubr.bf16.gmra.mxu0 %v1733
      %v1872 = vpop.f32.mrf.mxu0
      %v1873 = vadd.f32 0.0, %v1872
      %v1874 = vpop.f32.mrf.mxu0
      %v1875 = vadd.f32 0.0, %v1874
      %v1876 = vpop.f32.mrf.mxu0
      %v1877 = vadd.f32 0.0, %v1876
      %v1878 = vpop.f32.mrf.mxu0
      %v1879 = vadd.f32 0.0, %v1878
      %1880 = vdwg.mxu0
      %1881 = vmatprep.subr.bf16.mxu0 0
      %1882 = vmatpush1.bf16.msra.mxu0 0
      %1883 = vmatprep.subr.bf16.mxu0 0
      %1884 = vmatpush1.bf16.msra.mxu0 0
      %1885 = vmatprep.subr.bf16.mxu0 0
      %1886 = vmatpush1.bf16.msra.mxu0 0
      %1887 = vmatprep.subr.bf16.mxu0 0
      %1888 = vmatpush1.bf16.msra.mxu0 0
      %1889 = vmatprep.subr.bf16.mxu0 0
      %1890 = vmatpush1.bf16.msra.mxu0 0
      %1891 = vmatprep.subr.bf16.mxu0 0
      %1892 = vmatpush1.bf16.msra.mxu0 0
      %1893 = vmatprep.subr.bf16.mxu0 %v1699
      %1894 = vmatpush1.bf16.msra.mxu0 %v1698
      %1895 = vmatprep.subr.bf16.mxu0 %v1691
      %1896 = vmatpush1.bf16.msra.mxu0 %v1690
      %1897 = vmatprep.subr.bf16.mxu0 0
      %1898 = vmatpush2.bf16.msra.mxu0 0
      %1899 = vmatprep.subr.bf16.mxu0 0
      %1900 = vmatpush2.bf16.msra.mxu0 0
      %1901 = vmatprep.subr.bf16.mxu0 0
      %1902 = vmatpush2.bf16.msra.mxu0 0
      %1903 = vmatprep.subr.bf16.mxu0 0
      %1904 = vmatpush2.bf16.msra.mxu0 0
      %1905 = vmatprep.subr.bf16.mxu0 0
      %1906 = vmatpush2.bf16.msra.mxu0 0
      %1907 = vmatprep.subr.bf16.mxu0 0
      %1908 = vmatpush2.bf16.msra.mxu0 0
      %1909 = vmatprep.subr.bf16.mxu0 0
      %1910 = vmatpush2.bf16.msra.mxu0 0
      %1911 = vmatprep.subr.bf16.mxu0 0
      %1912 = vmatpush2.bf16.msra.mxu0 0
      %1913 = vmatprep.mubr.bf16.mxu0 0
      %1914 = vmatmul.mubr.bf16.gmra.mxu0 %v1724
      %v1915 = vpop.f32.mrf.mxu0
      %v1916 = vadd.f32 0.0, %v1915
      %v1917 = vpop.f32.mrf.mxu0
      %v1918 = vadd.f32 0.0, %v1917
      %v1919 = vpop.f32.mrf.mxu0
      %v1920 = vadd.f32 0.0, %v1919
      %v1921 = vpop.f32.mrf.mxu0
      %v1922 = vadd.f32 0.0, %v1921
      %1923 = vmatprep.mubr.bf16.mxu0 0
      %1924 = vmatmul.mubr.bf16.gmra.mxu0 %v1727
      %v1925 = vpop.f32.mrf.mxu0
      %v1926 = vadd.f32 0.0, %v1925
      %v1927 = vpop.f32.mrf.mxu0
      %v1928 = vadd.f32 0.0, %v1927
      %v1929 = vpop.f32.mrf.mxu0
      %v1930 = vadd.f32 0.0, %v1929
      %v1931 = vpop.f32.mrf.mxu0
      %v1932 = vadd.f32 0.0, %v1931
      %1933 = vmatprep.mubr.bf16.mxu0 0
      %1934 = vmatmul.mubr.bf16.gmra.mxu0 %v1730
      %v1935 = vpop.f32.mrf.mxu0
      %v1936 = vadd.f32 0.0, %v1935
      %v1937 = vpop.f32.mrf.mxu0
      %v1938 = vadd.f32 0.0, %v1937
      %v1939 = vpop.f32.mrf.mxu0
      %v1940 = vadd.f32 0.0, %v1939
      %v1941 = vpop.f32.mrf.mxu0
      %v1942 = vadd.f32 0.0, %v1941
      %1943 = vmatprep.mubr.bf16.mxu0 0
      %1944 = vmatmul.mubr.bf16.gmra.mxu0 %v1733
      %v1945 = vpop.f32.mrf.mxu0
      %v1946 = vadd.f32 0.0, %v1945
      %v1947 = vpop.f32.mrf.mxu0
      %v1948 = vadd.f32 0.0, %v1947
      %v1949 = vpop.f32.mrf.mxu0
      %v1950 = vadd.f32 0.0, %v1949
      %v1951 = vpop.f32.mrf.mxu0
      %v1952 = vadd.f32 0.0, %v1951
      %1953 = vdwg.mxu0
      %1954 = vmatprep.subr.bf16.mxu0 0
      %1955 = vmatpush1.bf16.msra.mxu0 0
      %1956 = vmatprep.subr.bf16.mxu0 0
      %1957 = vmatpush1.bf16.msra.mxu0 0
      %1958 = vmatprep.subr.bf16.mxu0 0
      %1959 = vmatpush1.bf16.msra.mxu0 0
      %1960 = vmatprep.subr.bf16.mxu0 0
      %1961 = vmatpush1.bf16.msra.mxu0 0
      %1962 = vmatprep.subr.bf16.mxu0 0
      %1963 = vmatpush1.bf16.msra.mxu0 0
      %1964 = vmatprep.subr.bf16.mxu0 0
      %1965 = vmatpush1.bf16.msra.mxu0 0
      %1966 = vmatprep.subr.bf16.mxu0 %v1701
      %1967 = vmatpush1.bf16.msra.mxu0 %v1700
      %1968 = vmatprep.subr.bf16.mxu0 %v1693
      %1969 = vmatpush1.bf16.msra.mxu0 %v1692
      %1970 = vmatprep.subr.bf16.mxu0 0
      %1971 = vmatpush2.bf16.msra.mxu0 0
      %1972 = vmatprep.subr.bf16.mxu0 0
      %1973 = vmatpush2.bf16.msra.mxu0 0
      %1974 = vmatprep.subr.bf16.mxu0 0
      %1975 = vmatpush2.bf16.msra.mxu0 0
      %1976 = vmatprep.subr.bf16.mxu0 0
      %1977 = vmatpush2.bf16.msra.mxu0 0
      %1978 = vmatprep.subr.bf16.mxu0 0
      %1979 = vmatpush2.bf16.msra.mxu0 0
      %1980 = vmatprep.subr.bf16.mxu0 0
      %1981 = vmatpush2.bf16.msra.mxu0 0
      %1982 = vmatprep.subr.bf16.mxu0 0
      %1983 = vmatpush2.bf16.msra.mxu0 0
      %1984 = vmatprep.subr.bf16.mxu0 0
      %1985 = vmatpush2.bf16.msra.mxu0 0
      %1986 = vmatprep.mubr.bf16.mxu0 0
      %1987 = vmatmul.mubr.bf16.gmra.mxu0 %v1724
      %v1988 = vpop.f32.mrf.mxu0
      %v1989 = vadd.f32 0.0, %v1988
      %v1990 = vpop.f32.mrf.mxu0
      %v1991 = vadd.f32 0.0, %v1990
      %v1992 = vpop.f32.mrf.mxu0
      %v1993 = vadd.f32 0.0, %v1992
      %v1994 = vpop.f32.mrf.mxu0
      %v1995 = vadd.f32 0.0, %v1994
      %1996 = vmatprep.mubr.bf16.mxu0 0
      %1997 = vmatmul.mubr.bf16.gmra.mxu0 %v1727
      %v1998 = vpop.f32.mrf.mxu0
      %v1999 = vadd.f32 0.0, %v1998
      %v2000 = vpop.f32.mrf.mxu0
      %v2001 = vadd.f32 0.0, %v2000
      %v2002 = vpop.f32.mrf.mxu0
      %v2003 = vadd.f32 0.0, %v2002
      %v2004 = vpop.f32.mrf.mxu0
      %v2005 = vadd.f32 0.0, %v2004
      %2006 = vmatprep.mubr.bf16.mxu0 0
      %2007 = vmatmul.mubr.bf16.gmra.mxu0 %v1730
      %v2008 = vpop.f32.mrf.mxu0
      %v2009 = vadd.f32 0.0, %v2008
      %v2010 = vpop.f32.mrf.mxu0
      %v2011 = vadd.f32 0.0, %v2010
      %v2012 = vpop.f32.mrf.mxu0
      %v2013 = vadd.f32 0.0, %v2012
      %v2014 = vpop.f32.mrf.mxu0
      %v2015 = vadd.f32 0.0, %v2014
      %2016 = vmatprep.mubr.bf16.mxu0 0
      %2017 = vmatmul.mubr.bf16.gmra.mxu0 %v1733
      %v2018 = vpop.f32.mrf.mxu0
      %v2019 = vadd.f32 0.0, %v2018
      %v2020 = vpop.f32.mrf.mxu0
      %v2021 = vadd.f32 0.0, %v2020
      %v2022 = vpop.f32.mrf.mxu0
      %v2023 = vadd.f32 0.0, %v2022
      %v2024 = vpop.f32.mrf.mxu0
      %v2025 = vadd.f32 0.0, %v2024
      %2026 = vdwg.mxu0
      %v2027 = vld [vmem:[%s8] sm:$0xff]
      %v2028 = vld [vmem:[%s8 + $0x8] sm:$0xff]
      %v2029 = vld [vmem:[%s8 + $0x10] sm:$0xff]
      %v2030 = vld [vmem:[%s8 + $0x18] sm:$0xff]
      %v2031 = vld [vmem:[%s8 + $0x20] sm:$0xff]
      %v2032 = vld [vmem:[%s8 + $0x28] sm:$0xff]
      %v2033 = vld [vmem:[%s8 + $0x30] sm:$0xff]
      %v2034 = vld [vmem:[%s8 + $0x38] sm:$0xff]
      %2036 = vset.pattern.permute.xlu0 0
      %2037 = vperm.xlu0 %2036, %v2027
      %v2038 = vpop.permute.xlu0 %2037
      %2041 = vset.pattern.permute.xlu0 0
      %2042 = vperm.xlu0 %2041, %v2028
      %v2043 = vpop.permute.xlu0 %2042
      %2046 = vset.pattern.permute.xlu0 0
      %2047 = vperm.xlu0 %2046, %v2029
      %v2048 = vpop.permute.xlu0 %2047
      %2051 = vset.pattern.permute.xlu0 0
      %2052 = vperm.xlu0 %2051, %v2030
      %v2053 = vpop.permute.xlu0 %2052
      %2056 = vset.pattern.permute.xlu0 0
      %2057 = vperm.xlu0 %2056, %v2031
      %v2058 = vpop.permute.xlu0 %2057
      %2061 = vset.pattern.permute.xlu0 0
      %2062 = vperm.xlu0 %2061, %v2032
      %v2063 = vpop.permute.xlu0 %2062
      %2066 = vset.pattern.permute.xlu0 0
      %2067 = vperm.xlu0 %2066, %v2033
      %v2068 = vpop.permute.xlu0 %2067
      %2071 = vset.pattern.permute.xlu0 0
      %2072 = vperm.xlu0 %2071, %v2034
      %v2073 = vpop.permute.xlu0 %2072
      %v2075 = vmul.f32 %v1770, %v2038
      %v2076 = vmul.f32 %v1772, %v2038
      %v2077 = vmul.f32 %v1843, %v2038
      %v2078 = vmul.f32 %v1845, %v2038
      %v2079 = vmul.f32 %v1916, %v2038
      %v2080 = vmul.f32 %v1918, %v2038
      %v2081 = vmul.f32 %v1989, %v2038
      %v2082 = vmul.f32 %v1991, %v2038
      %v2083 = vmul.f32 %v1774, %v2043
      %v2084 = vmul.f32 %v1776, %v2043
      %v2085 = vmul.f32 %v1847, %v2043
      %v2086 = vmul.f32 %v1849, %v2043
      %v2087 = vmul.f32 %v1920, %v2043
      %v2088 = vmul.f32 %v1922, %v2043
      %v2089 = vmul.f32 %v1993, %v2043
      %v2090 = vmul.f32 %v1995, %v2043
      %v2091 = vmul.f32 %v1780, %v2048
      %v2092 = vmul.f32 %v1782, %v2048
      %v2093 = vmul.f32 %v1853, %v2048
      %v2094 = vmul.f32 %v1855, %v2048
      %v2095 = vmul.f32 %v1926, %v2048
      %v2096 = vmul.f32 %v1928, %v2048
      %v2097 = vmul.f32 %v1999, %v2048
      %v2098 = vmul.f32 %v2001, %v2048
      %v2099 = vmul.f32 %v1784, %v2053
      %v2100 = vmul.f32 %v1786, %v2053
      %v2101 = vmul.f32 %v1857, %v2053
      %v2102 = vmul.f32 %v1859, %v2053
      %v2103 = vmul.f32 %v1930, %v2053
      %v2104 = vmul.f32 %v1932, %v2053
      %v2105 = vmul.f32 %v2003, %v2053
      %v2106 = vmul.f32 %v2005, %v2053
      %v2107 = vmul.f32 %v1790, %v2058
      %v2108 = vmul.f32 %v1792, %v2058
      %v2109 = vmul.f32 %v1863, %v2058
      %v2110 = vmul.f32 %v1865, %v2058
      %v2111 = vmul.f32 %v1936, %v2058
      %v2112 = vmul.f32 %v1938, %v2058
      %v2113 = vmul.f32 %v2009, %v2058
      %v2114 = vmul.f32 %v2011, %v2058
      %v2115 = vmul.f32 %v1794, %v2063
      %v2116 = vmul.f32 %v1796, %v2063
      %v2117 = vmul.f32 %v1867, %v2063
      %v2118 = vmul.f32 %v1869, %v2063
      %v2119 = vmul.f32 %v1940, %v2063
      %v2120 = vmul.f32 %v1942, %v2063
      %v2121 = vmul.f32 %v2013, %v2063
      %v2122 = vmul.f32 %v2015, %v2063
      %v2123 = vmul.f32 %v1800, %v2068
      %v2124 = vmul.f32 %v1802, %v2068
      %v2125 = vmul.f32 %v1873, %v2068
      %v2126 = vmul.f32 %v1875, %v2068
      %v2127 = vmul.f32 %v1946, %v2068
      %v2128 = vmul.f32 %v1948, %v2068
      %v2129 = vmul.f32 %v2019, %v2068
      %v2130 = vmul.f32 %v2021, %v2068
      %v2131 = vmul.f32 %v1804, %v2073
      %v2132 = vmul.f32 %v1806, %v2073
      %v2133 = vmul.f32 %v1877, %v2073
      %v2134 = vmul.f32 %v1879, %v2073
      %v2135 = vmul.f32 %v1950, %v2073
      %v2136 = vmul.f32 %v1952, %v2073
      %v2137 = vmul.f32 %v2023, %v2073
      %v2138 = vmul.f32 %v2025, %v2073
      %v2139 = vld [vmem:[%s9] sm:$0xff]
      %v2140 = vld [vmem:[%s9 + $0x8] sm:$0xff]
      %v2141 = vld [vmem:[%s9 + $0x10] sm:$0xff]
      %v2142 = vld [vmem:[%s9 + $0x18] sm:$0xff]
      %v2143 = vld [vmem:[%s9 + $0x20] sm:$0xff]
      %v2144 = vld [vmem:[%s9 + $0x28] sm:$0xff]
      %v2145 = vld [vmem:[%s9 + $0x30] sm:$0xff]
      %v2146 = vld [vmem:[%s9 + $0x38] sm:$0xff]
      %2148 = vset.pattern.permute.xlu0 0
      %2149 = vperm.xlu0 %2148, %v2139
      %v2150 = vpop.permute.xlu0 %2149
      %2153 = vset.pattern.permute.xlu0 0
      %2154 = vperm.xlu0 %2153, %v2140
      %v2155 = vpop.permute.xlu0 %2154
      %2158 = vset.pattern.permute.xlu0 0
      %2159 = vperm.xlu0 %2158, %v2141
      %v2160 = vpop.permute.xlu0 %2159
      %2163 = vset.pattern.permute.xlu0 0
      %2164 = vperm.xlu0 %2163, %v2142
      %v2165 = vpop.permute.xlu0 %2164
      %2168 = vset.pattern.permute.xlu0 0
      %2169 = vperm.xlu0 %2168, %v2143
      %v2170 = vpop.permute.xlu0 %2169
      %2173 = vset.pattern.permute.xlu0 0
      %2174 = vperm.xlu0 %2173, %v2144
      %v2175 = vpop.permute.xlu0 %2174
      %2178 = vset.pattern.permute.xlu0 0
      %2179 = vperm.xlu0 %2178, %v2145
      %v2180 = vpop.permute.xlu0 %2179
      %2183 = vset.pattern.permute.xlu0 0
      %2184 = vperm.xlu0 %2183, %v2146
      %v2185 = vpop.permute.xlu0 %2184
      %v2187 = vadd.f32 %v2075, %v2150
      %v2188 = vadd.f32 %v2076, %v2150
      %v2189 = vadd.f32 %v2077, %v2150
      %v2190 = vadd.f32 %v2078, %v2150
      %v2191 = vadd.f32 %v2079, %v2150
      %v2192 = vadd.f32 %v2080, %v2150
      %v2193 = vadd.f32 %v2081, %v2150
      %v2194 = vadd.f32 %v2082, %v2150
      %v2195 = vadd.f32 %v2083, %v2155
      %v2196 = vadd.f32 %v2084, %v2155
      %v2197 = vadd.f32 %v2085, %v2155
      %v2198 = vadd.f32 %v2086, %v2155
      %v2199 = vadd.f32 %v2087, %v2155
      %v2200 = vadd.f32 %v2088, %v2155
      %v2201 = vadd.f32 %v2089, %v2155
      %v2202 = vadd.f32 %v2090, %v2155
      %v2203 = vadd.f32 %v2091, %v2160
      %v2204 = vadd.f32 %v2092, %v2160
      %v2205 = vadd.f32 %v2093, %v2160
      %v2206 = vadd.f32 %v2094, %v2160
      %v2207 = vadd.f32 %v2095, %v2160
      %v2208 = vadd.f32 %v2096, %v2160
      %v2209 = vadd.f32 %v2097, %v2160
      %v2210 = vadd.f32 %v2098, %v2160
      %v2211 = vadd.f32 %v2099, %v2165
      %v2212 = vadd.f32 %v2100, %v2165
      %v2213 = vadd.f32 %v2101, %v2165
      %v2214 = vadd.f32 %v2102, %v2165
      %v2215 = vadd.f32 %v2103, %v2165
      %v2216 = vadd.f32 %v2104, %v2165
      %v2217 = vadd.f32 %v2105, %v2165
      %v2218 = vadd.f32 %v2106, %v2165
      %v2219 = vadd.f32 %v2107, %v2170
      %v2220 = vadd.f32 %v2108, %v2170
      %v2221 = vadd.f32 %v2109, %v2170
      %v2222 = vadd.f32 %v2110, %v2170
      %v2223 = vadd.f32 %v2111, %v2170
      %v2224 = vadd.f32 %v2112, %v2170
      %v2225 = vadd.f32 %v2113, %v2170
      %v2226 = vadd.f32 %v2114, %v2170
      %v2227 = vadd.f32 %v2115, %v2175
      %v2228 = vadd.f32 %v2116, %v2175
      %v2229 = vadd.f32 %v2117, %v2175
      %v2230 = vadd.f32 %v2118, %v2175
      %v2231 = vadd.f32 %v2119, %v2175
      %v2232 = vadd.f32 %v2120, %v2175
      %v2233 = vadd.f32 %v2121, %v2175
      %v2234 = vadd.f32 %v2122, %v2175
      %v2235 = vadd.f32 %v2123, %v2180
      %v2236 = vadd.f32 %v2124, %v2180
      %v2237 = vadd.f32 %v2125, %v2180
      %v2238 = vadd.f32 %v2126, %v2180
      %v2239 = vadd.f32 %v2127, %v2180
      %v2240 = vadd.f32 %v2128, %v2180
      %v2241 = vadd.f32 %v2129, %v2180
      %v2242 = vadd.f32 %v2130, %v2180
      %v2243 = vadd.f32 %v2131, %v2185
      %v2244 = vadd.f32 %v2132, %v2185
      %v2245 = vadd.f32 %v2133, %v2185
      %v2246 = vadd.f32 %v2134, %v2185
      %v2247 = vadd.f32 %v2135, %v2185
      %v2248 = vadd.f32 %v2136, %v2185
      %v2249 = vadd.f32 %v2137, %v2185
      %v2250 = vadd.f32 %v2138, %v2185
      %v2251 = vmax.f32 %v2187, 0.0
      %v2252 = vmax.f32 %v2188, 0.0
      %v2253 = vmax.f32 %v2189, 0.0
      %v2254 = vmax.f32 %v2190, 0.0
      %v2255 = vmax.f32 %v2191, 0.0
      %v2256 = vmax.f32 %v2192, 0.0
      %v2257 = vmax.f32 %v2193, 0.0
      %v2258 = vmax.f32 %v2194, 0.0
      %v2259 = vmax.f32 %v2195, 0.0
      %v2260 = vmax.f32 %v2196, 0.0
      %v2261 = vmax.f32 %v2197, 0.0
      %v2262 = vmax.f32 %v2198, 0.0
      %v2263 = vmax.f32 %v2199, 0.0
      %v2264 = vmax.f32 %v2200, 0.0
      %v2265 = vmax.f32 %v2201, 0.0
      %v2266 = vmax.f32 %v2202, 0.0
      %v2267 = vmax.f32 %v2203, 0.0
      %v2268 = vmax.f32 %v2204, 0.0
      %v2269 = vmax.f32 %v2205, 0.0
      %v2270 = vmax.f32 %v2206, 0.0
      %v2271 = vmax.f32 %v2207, 0.0
      %v2272 = vmax.f32 %v2208, 0.0
      %v2273 = vmax.f32 %v2209, 0.0
      %v2274 = vmax.f32 %v2210, 0.0
      %v2275 = vmax.f32 %v2211, 0.0
      %v2276 = vmax.f32 %v2212, 0.0
      %v2277 = vmax.f32 %v2213, 0.0
      %v2278 = vmax.f32 %v2214, 0.0
      %v2279 = vmax.f32 %v2215, 0.0
      %v2280 = vmax.f32 %v2216, 0.0
      %v2281 = vmax.f32 %v2217, 0.0
      %v2282 = vmax.f32 %v2218, 0.0
      %v2283 = vmax.f32 %v2219, 0.0
      %v2284 = vmax.f32 %v2220, 0.0
      %v2285 = vmax.f32 %v2221, 0.0
      %v2286 = vmax.f32 %v2222, 0.0
      %v2287 = vmax.f32 %v2223, 0.0
      %v2288 = vmax.f32 %v2224, 0.0
      %v2289 = vmax.f32 %v2225, 0.0
      %v2290 = vmax.f32 %v2226, 0.0
      %v2291 = vmax.f32 %v2227, 0.0
      %v2292 = vmax.f32 %v2228, 0.0
      %v2293 = vmax.f32 %v2229, 0.0
      %v2294 = vmax.f32 %v2230, 0.0
      %v2295 = vmax.f32 %v2231, 0.0
      %v2296 = vmax.f32 %v2232, 0.0
      %v2297 = vmax.f32 %v2233, 0.0
      %v2298 = vmax.f32 %v2234, 0.0
      %v2299 = vmax.f32 %v2235, 0.0
      %v2300 = vmax.f32 %v2236, 0.0
      %v2301 = vmax.f32 %v2237, 0.0
      %v2302 = vmax.f32 %v2238, 0.0
      %v2303 = vmax.f32 %v2239, 0.0
      %v2304 = vmax.f32 %v2240, 0.0
      %v2305 = vmax.f32 %v2241, 0.0
      %v2306 = vmax.f32 %v2242, 0.0
      %v2307 = vmax.f32 %v2243, 0.0
      %v2308 = vmax.f32 %v2244, 0.0
      %v2309 = vmax.f32 %v2245, 0.0
      %v2310 = vmax.f32 %v2246, 0.0
      %v2311 = vmax.f32 %v2247, 0.0
      %v2312 = vmax.f32 %v2248, 0.0
      %v2313 = vmax.f32 %v2249, 0.0
      %v2314 = vmax.f32 %v2250, 0.0
      %2315 = vst [vmem:[%s359] sm:$0xff] %v2251
      %2316 = vst [vmem:[%s359 + $0x8] sm:$0xff] %v2252
      %2317 = vst [vmem:[%s359 + $0x10] sm:$0xff] %v2253
      %2318 = vst [vmem:[%s359 + $0x18] sm:$0xff] %v2254
      %2319 = vst [vmem:[%s359 + $0x20] sm:$0xff] %v2255
      %2320 = vst [vmem:[%s359 + $0x28] sm:$0xff] %v2256
      %2321 = vst [vmem:[%s359 + $0x30] sm:$0xff] %v2257
      %2322 = vst [vmem:[%s359 + $0x38] sm:$0xff] %v2258
      %2323 = vst [vmem:[%s359 + $0x40] sm:$0xff] %v2259
      %2324 = vst [vmem:[%s359 + $0x48] sm:$0xff] %v2260
      %2325 = vst [vmem:[%s359 + $0x50] sm:$0xff] %v2261
      %2326 = vst [vmem:[%s359 + $0x58] sm:$0xff] %v2262
      %2327 = vst [vmem:[%s359 + $0x60] sm:$0xff] %v2263
      %2328 = vst [vmem:[%s359 + $0x68] sm:$0xff] %v2264
      %2329 = vst [vmem:[%s359 + $0x70] sm:$0xff] %v2265
      %2330 = vst [vmem:[%s359 + $0x78] sm:$0xff] %v2266
      %2331 = vst [vmem:[%s359 + $0x80] sm:$0xff] %v2267
      %2332 = vst [vmem:[%s359 + $0x88] sm:$0xff] %v2268
      %2333 = vst [vmem:[%s359 + $0x90] sm:$0xff] %v2269
      %2334 = vst [vmem:[%s359 + $0x98] sm:$0xff] %v2270
      %2335 = vst [vmem:[%s359 + $0xa0] sm:$0xff] %v2271
      %2336 = vst [vmem:[%s359 + $0xa8] sm:$0xff] %v2272
      %2337 = vst [vmem:[%s359 + $0xb0] sm:$0xff] %v2273
      %2338 = vst [vmem:[%s359 + $0xb8] sm:$0xff] %v2274
      %2339 = vst [vmem:[%s359 + $0xc0] sm:$0xff] %v2275
      %2340 = vst [vmem:[%s359 + $0xc8] sm:$0xff] %v2276
      %2341 = vst [vmem:[%s359 + $0xd0] sm:$0xff] %v2277
      %2342 = vst [vmem:[%s359 + $0xd8] sm:$0xff] %v2278
      %2343 = vst [vmem:[%s359 + $0xe0] sm:$0xff] %v2279
      %2344 = vst [vmem:[%s359 + $0xe8] sm:$0xff] %v2280
      %2345 = vst [vmem:[%s359 + $0xf0] sm:$0xff] %v2281
      %2346 = vst [vmem:[%s359 + $0xf8] sm:$0xff] %v2282
      %2347 = vst [vmem:[%s359 + $0x100] sm:$0xff] %v2283
      %2348 = vst [vmem:[%s359 + $0x108] sm:$0xff] %v2284
      %2349 = vst [vmem:[%s359 + $0x110] sm:$0xff] %v2285
      %2350 = vst [vmem:[%s359 + $0x118] sm:$0xff] %v2286
      %2351 = vst [vmem:[%s359 + $0x120] sm:$0xff] %v2287
      %2352 = vst [vmem:[%s359 + $0x128] sm:$0xff] %v2288
      %2353 = vst [vmem:[%s359 + $0x130] sm:$0xff] %v2289
      %2354 = vst [vmem:[%s359 + $0x138] sm:$0xff] %v2290
      %2355 = vst [vmem:[%s359 + $0x140] sm:$0xff] %v2291
      %2356 = vst [vmem:[%s359 + $0x148] sm:$0xff] %v2292
      %2357 = vst [vmem:[%s359 + $0x150] sm:$0xff] %v2293
      %2358 = vst [vmem:[%s359 + $0x158] sm:$0xff] %v2294
      %2359 = vst [vmem:[%s359 + $0x160] sm:$0xff] %v2295
      %2360 = vst [vmem:[%s359 + $0x168] sm:$0xff] %v2296
      %2361 = vst [vmem:[%s359 + $0x170] sm:$0xff] %v2297
      %2362 = vst [vmem:[%s359 + $0x178] sm:$0xff] %v2298
      %2363 = vst [vmem:[%s359 + $0x180] sm:$0xff] %v2299
      %2364 = vst [vmem:[%s359 + $0x188] sm:$0xff] %v2300
      %2365 = vst [vmem:[%s359 + $0x190] sm:$0xff] %v2301
      %2366 = vst [vmem:[%s359 + $0x198] sm:$0xff] %v2302
      %2367 = vst [vmem:[%s359 + $0x1a0] sm:$0xff] %v2303
      %2368 = vst [vmem:[%s359 + $0x1a8] sm:$0xff] %v2304
      %2369 = vst [vmem:[%s359 + $0x1b0] sm:$0xff] %v2305
      %2370 = vst [vmem:[%s359 + $0x1b8] sm:$0xff] %v2306
      %2371 = vst [vmem:[%s359 + $0x1c0] sm:$0xff] %v2307
      %2372 = vst [vmem:[%s359 + $0x1c8] sm:$0xff] %v2308
      %2373 = vst [vmem:[%s359 + $0x1d0] sm:$0xff] %v2309
      %2374 = vst [vmem:[%s359 + $0x1d8] sm:$0xff] %v2310
      %2375 = vst [vmem:[%s359 + $0x1e0] sm:$0xff] %v2311
      %2376 = vst [vmem:[%s359 + $0x1e8] sm:$0xff] %v2312
      %2377 = vst [vmem:[%s359 + $0x1f0] sm:$0xff] %v2313
      %2378 = vst [vmem:[%s359 + $0x1f8] sm:$0xff] %v2314
      %p2379 = scmp.lt.s32.totalorder %s21, 1
      %s2380 = scalar_select %p2379, %s21, 1
      %s2381 = smul.addr %s2380, 64
      %s2382 = smul.addr %s2381, 8
      %s2383 = scalar_lea.vmem %s10, %s2382
      // Predicated region
      $region61: #{decoder_block_forward.1} parent=59 // pred_check
        %p2384 = pneg %p254
      $region62: #{decoder_block_forward.1} parent=59 // pred_check_branch
        %2386 = sbr.rel (%p2384) target = $region64
      $region63: #{decoder_block_forward.1} parent=59 // pred_region
        _
      $region64: #{decoder_block_forward.1} parent=59 // pred_fallthru
        _
    $region60: #{decoder_block_forward.1} parent=5 // pred_fallthru
      _
    %p2387 = scmp.le.s32.totalorder 2, %s16
    // Predicated region
    $region65: #{decoder_block_forward.1} parent=5 // pred_check
      %p2388 = pneg %p2387
    $region66: #{decoder_block_forward.1} parent=5 // pred_check_branch
      %2390 = sbr.rel (%p2388) target = $region68
    $region67: #{decoder_block_forward.1} parent=5 // pred_region
      %s2391 = ssub.s32 %s16, 2
      // Predicated region
      $region69: #{decoder_block_forward.1} parent=67 // pred_check
        %p2392 = pneg %p260
      $region70: #{decoder_block_forward.1} parent=67 // pred_check_branch
        %2394 = sbr.rel (%p2392) target = $region72
      $region71: #{decoder_block_forward.1} parent=67 // pred_region
        %p2395 = scmp.lt.s32.totalorder %s22, 1
        %s2396 = scalar_select %p2395, %s22, 1
        %s2397 = smul.addr %s2396, 64
        %s2398 = smul.addr %s2397, 8
        %s2399 = scalar_lea.vmem %s10, %s2398
      $region72: #{decoder_block_forward.1} parent=67 // pred_fallthru
        _
    $region68: #{decoder_block_forward.1} parent=5 // pred_fallthru
      _
  $region6: #{decoder_block_forward.1} parent=0 // loop_footer
    %s20 = sadd.s32 1, %s16
  $region7: #{decoder_block_forward.1} parent=0 // loop_footer_branch
    %15 = sbr.rel target = $region3
  $region8: #{decoder_block_forward.1} parent=0 // loop_exit
    _

</llo_original>
